<compile_context>
chip_gen: v7x
topology: tpu7x:2x2x1
jax: 0.10.0
libtpu: 0.0.40
codegen_flags: <defaults>
</compile_context>

<pallas_src>
import jax
import jax.numpy as jnp
from jax.experimental import pallas as pl
from jax.experimental.pallas import tpu as pltpu

# Matmul operand dtype.  f32 keeps the kernel numerically tight vs. the PyTorch /
# pure-JAX reference (1e-3).  On v6e/v7x set to jnp.bfloat16 (f32 accumulation is
# kept via preferred_element_type) for ~2x fewer MXU passes, at ~1e-2 accuracy.
MATMUL_DTYPE = jnp.float32


def _make_screwing_kernel(num_layers, seq_len, batch, hidden_dim, matmul_dtype):
    H = hidden_dim
    T = seq_len
    B = batch

    def mm(a, b):
        return jnp.dot(a.astype(matmul_dtype), b.astype(matmul_dtype),
                       preferred_element_type=jnp.float32)

    def kernel(*refs):
        # refs: x_flat, [w_ih_l, w_hh_l, b_l] * num_layers, w_out, b_out, out_ref
        x_ref = refs[0]                                            # (T*B, D_in)
        layer_refs = [refs[1 + 3 * l: 4 + 3 * l] for l in range(num_layers)]
        w_out_ref = refs[1 + 3 * num_layers]                       # (H, O)
        b_out_ref = refs[2 + 3 * num_layers]                       # (1, O)
        out_ref = refs[3 + 3 * num_layers]                         # (B, O)

        # ---- Layer-0 input projection, hoisted: ONE big matmul + bias. ----
        w_ih0_ref, _, b0_ref = layer_refs[0]
        gx_all = mm(x_ref[...], w_ih0_ref[...]) + b0_ref[...]      # (T*B, 4H)
        # Per-timestep (B, 4H) slabs (static slices, off the recurrent chain).
        gx = [gx_all[t * B:(t + 1) * B, :] for t in range(T)]

        h_last = None
        for l in range(num_layers):
            w_hh = layer_refs[l][1][...]                           # (H, 4H)
            fuse_next = (l + 1 < num_layers)
            if fuse_next:
                w_ih_nxt = layer_refs[l + 1][0][...]               # (H, 4H)
                b_nxt = layer_refs[l + 1][2][...]                  # (1, 4H)
                gx_next = []

            # h / c carried as values (vregs) through a fully-unrolled loop.
            h = jnp.zeros((B, H), jnp.float32)
            c = jnp.zeros((B, H), jnp.float32)

            for t in range(T):
                # Only recurrent matmul left on the serial per-step path.
                gates = gx[t] + mm(h, w_hh)                        # (B, 4H) i,f,g,o
                i_g = jax.nn.sigmoid(gates[:, 0 * H:1 * H])
                f_g = jax.nn.sigmoid(gates[:, 1 * H:2 * H])
                g_g = jnp.tanh(gates[:, 2 * H:3 * H])
                o_g = jax.nn.sigmoid(gates[:, 3 * H:4 * H])
                c = f_g * c + i_g * g_g
                h = o_g * jnp.tanh(c)
                if fuse_next:
                    # Next layer's input projection for step t: independent of the
                    # remainder of this layer's recurrence -> overlaps with it.
                    gx_next.append(mm(h, w_ih_nxt) + b_nxt)

            if fuse_next:
                gx = gx_next
            h_last = h                                             # last timestep

        # hidden2out Linear on the top layer's last hidden state only.
        out_ref[...] = mm(h_last, w_out_ref[...]) + b_out_ref[...]

    return kernel


def screwing_model_forward(x, params):
    """x: (B, T, input_dim), exactly like the batch_first PyTorch module."""
    x = x.astype(jnp.float32)
    B, T, D = x.shape
    H = params["hidden_dim"]
    L = params["num_layers"]
    O = params["output_dim"]

    # Time-major, flattened to (T*B, D) so the layer-0 projection is one matmul.
    x_flat = jnp.transpose(x, (1, 0, 2)).reshape(T * B, D)

    kernel_inputs = [x_flat]
    for l in range(L):
        w_ih = params[f"weight_ih_l{l}"]                 # (4H, D_l)
        w_hh = params[f"weight_hh_l{l}"]                 # (4H, H)
        b = params[f"bias_ih_l{l}"] + params[f"bias_hh_l{l}"]
        kernel_inputs.append(jnp.transpose(w_ih))        # (D_l, 4H)
        kernel_inputs.append(jnp.transpose(w_hh))        # (H, 4H)
        kernel_inputs.append(b.reshape(1, 4 * H))
    kernel_inputs.append(jnp.transpose(params["hidden2out_w"]))   # (H, O)
    kernel_inputs.append(params["hidden2out_b"].reshape(1, O))

    kernel = _make_screwing_kernel(L, T, B, H, MATMUL_DTYPE)

    # Single program: the recurrence is serial in T*L regardless of batch, and at
    # toy batch a batch grid would only slow single-TC chips (v5e/v6e).
    # TODO(synk): add a "parallel" batch grid axis (dimension_semantics) once B is
    # large enough to split across v7x's two TensorCores.
    out = pl.pallas_call(
        kernel,
        out_shape=jax.ShapeDtypeStruct((B, O), jnp.float32),
        in_specs=[pl.BlockSpec(memory_space=pltpu.MemorySpace.VMEM)
                  for _ in kernel_inputs],
        out_specs=pl.BlockSpec(memory_space=pltpu.MemorySpace.VMEM),
        compiler_params=pltpu.CompilerParams(vmem_limit_bytes=32 * 1024 * 1024),
    )(*kernel_inputs)
    return out


def init_params(key, input_dim, hidden_dim, num_layers, output_dim):
    """Deterministic synthetic init matching PyTorch's U(-1/sqrt(H), 1/sqrt(H))."""
    k = 1.0 / (hidden_dim ** 0.5)
    params = {"hidden_dim": hidden_dim, "num_layers": num_layers,
              "output_dim": output_dim}
    for l in range(num_layers):
        d_in = input_dim if l == 0 else hidden_dim
        key, k1, k2, k3, k4 = jax.random.split(key, 5)
        params[f"weight_ih_l{l}"] = jax.random.uniform(
            k1, (4 * hidden_dim, d_in), jnp.float32, -k, k)
        params[f"weight_hh_l{l}"] = jax.random.uniform(
            k2, (4 * hidden_dim, hidden_dim), jnp.float32, -k, k)
        params[f"bias_ih_l{l}"] = jax.random.uniform(
            k3, (4 * hidden_dim,), jnp.float32, -k, k)
        params[f"bias_hh_l{l}"] = jax.random.uniform(
            k4, (4 * hidden_dim,), jnp.float32, -k, k)
    key, k1, k2 = jax.random.split(key, 3)
    params["hidden2out_w"] = jax.random.uniform(
        k1, (output_dim, hidden_dim), jnp.float32, -k, k)
    params["hidden2out_b"] = jax.random.uniform(
        k2, (output_dim,), jnp.float32, -k, k)
    return params


def reference_forward(x, params):
    """Pure-JAX reference mirroring the PyTorch forward semantics."""
    x = x.astype(jnp.float32)
    B, T, _ = x.shape
    H = params["hidden_dim"]
    h_seq = x
    for l in range(params["num_layers"]):
        w_ih = params[f"weight_ih_l{l}"]
        w_hh = params[f"weight_hh_l{l}"]
        b = params[f"bias_ih_l{l}"] + params[f"bias_hh_l{l}"]
        h = jnp.zeros((B, H), jnp.float32)
        c = jnp.zeros((B, H), jnp.float32)
        outs = []
        for t in range(T):
            gates = h_seq[:, t, :] @ w_ih.T + h @ w_hh.T + b
            i = jax.nn.sigmoid(gates[:, :H])
            f = jax.nn.sigmoid(gates[:, H:2 * H])
            g = jnp.tanh(gates[:, 2 * H:3 * H])
            o = jax.nn.sigmoid(gates[:, 3 * H:])
            c = f * c + i * g
            h = o * jnp.tanh(c)
            outs.append(h)
        h_seq = jnp.stack(outs, axis=1)
    return h_seq[:, -1, :] @ params["hidden2out_w"].T + params["hidden2out_b"]


if __name__ == "__main__":
    B, T, INPUT_DIM, HIDDEN_DIM, NUM_LAYERS, OUTPUT_DIM = 2, 8, 4, 32, 2, 3
    key = jax.random.PRNGKey(0)
    kx, kp = jax.random.split(key)
    x = jax.random.normal(kx, (B, T, INPUT_DIM), jnp.float32)
    params = init_params(kp, INPUT_DIM, HIDDEN_DIM, NUM_LAYERS, OUTPUT_DIM)

    out = screwing_model_forward(x, params)
    out = jax.block_until_ready(out)
    ref = reference_forward(x, params)

    assert out.shape == (B, OUTPUT_DIM), out.shape
    assert jnp.allclose(out, ref, atol=1e-3, rtol=1e-3), (out, ref)
    print("KERNEL_OK")
</pallas_src>

<mosaic_0001>
module attributes {stable_mosaic.version = 11 : i64} {
  func.func @kernel(%arg0: memref<16x4xf32, #tpu.memory_space<vmem>>, %arg1: memref<4x128xf32, #tpu.memory_space<vmem>>, %arg2: memref<32x128xf32, #tpu.memory_space<vmem>>, %arg3: memref<1x128xf32, #tpu.memory_space<vmem>>, %arg4: memref<32x128xf32, #tpu.memory_space<vmem>>, %arg5: memref<32x128xf32, #tpu.memory_space<vmem>>, %arg6: memref<1x128xf32, #tpu.memory_space<vmem>>, %arg7: memref<32x3xf32, #tpu.memory_space<vmem>>, %arg8: memref<1x3xf32, #tpu.memory_space<vmem>>, %arg9: memref<2x3xf32, #tpu.memory_space<vmem>>) attributes {dimension_semantics = [], scalar_prefetch = 0 : i64, scratch_operands = 0 : i64, tpu.core_type = #tpu.core_type<tc>} {
    %c0 = arith.constant 0 : index
    %c0_0 = arith.constant 0 : index
    %0 = vector.load %arg0[%c0, %c0_0] : memref<16x4xf32, #tpu.memory_space<vmem>>, vector<16x4xf32>
    %c0_1 = arith.constant 0 : index
    %c0_2 = arith.constant 0 : index
    %1 = vector.load %arg1[%c0_1, %c0_2] : memref<4x128xf32, #tpu.memory_space<vmem>>, vector<4x128xf32>
    %cst = arith.constant dense<0.000000e+00> : vector<16x128xf32>
    %2 = tpu.matmul %0, %1, %cst {dimension_numbers = #tpu.dot_dimension_numbers<[1], [0], [0], [1], [0, 0, 1, 1], [], []>} : vector<16x4xf32>, vector<4x128xf32>, vector<16x128xf32> -> vector<16x128xf32>
    %c0_3 = arith.constant 0 : index
    %c0_4 = arith.constant 0 : index
    %3 = vector.load %arg3[%c0_3, %c0_4] : memref<1x128xf32, #tpu.memory_space<vmem>>, vector<1x128xf32>
    %4 = vector.broadcast %3 : vector<1x128xf32> to vector<16x128xf32>
    %5 = arith.addf %2, %4 : vector<16x128xf32>
    %6 = vector.extract_strided_slice %5 {offsets = [0, 0], sizes = [2, 128], strides = [1, 1]} : vector<16x128xf32> to vector<2x128xf32>
    %7 = vector.extract_strided_slice %5 {offsets = [2, 0], sizes = [2, 128], strides = [1, 1]} : vector<16x128xf32> to vector<2x128xf32>
    %8 = vector.extract_strided_slice %5 {offsets = [4, 0], sizes = [2, 128], strides = [1, 1]} : vector<16x128xf32> to vector<2x128xf32>
    %9 = vector.extract_strided_slice %5 {offsets = [6, 0], sizes = [2, 128], strides = [1, 1]} : vector<16x128xf32> to vector<2x128xf32>
    %10 = vector.extract_strided_slice %5 {offsets = [8, 0], sizes = [2, 128], strides = [1, 1]} : vector<16x128xf32> to vector<2x128xf32>
    %11 = vector.extract_strided_slice %5 {offsets = [10, 0], sizes = [2, 128], strides = [1, 1]} : vector<16x128xf32> to vector<2x128xf32>
    %12 = vector.extract_strided_slice %5 {offsets = [12, 0], sizes = [2, 128], strides = [1, 1]} : vector<16x128xf32> to vector<2x128xf32>
    %13 = vector.extract_strided_slice %5 {offsets = [14, 0], sizes = [2, 128], strides = [1, 1]} : vector<16x128xf32> to vector<2x128xf32>
    %c0_5 = arith.constant 0 : index
    %c0_6 = arith.constant 0 : index
    %14 = vector.load %arg2[%c0_5, %c0_6] : memref<32x128xf32, #tpu.memory_space<vmem>>, vector<32x128xf32>
    %c0_7 = arith.constant 0 : index
    %c0_8 = arith.constant 0 : index
    %15 = vector.load %arg4[%c0_7, %c0_8] : memref<32x128xf32, #tpu.memory_space<vmem>>, vector<32x128xf32>
    %c0_9 = arith.constant 0 : index
    %c0_10 = arith.constant 0 : index
    %16 = vector.load %arg6[%c0_9, %c0_10] : memref<1x128xf32, #tpu.memory_space<vmem>>, vector<1x128xf32>
    %cst_11 = arith.constant 0.000000e+00 : f32
    %17 = vector.broadcast %cst_11 : f32 to vector<2x32xf32>
    %cst_12 = arith.constant 0.000000e+00 : f32
    %18 = vector.broadcast %cst_12 : f32 to vector<2x32xf32>
    %cst_13 = arith.constant dense<0.000000e+00> : vector<2x128xf32>
    %19 = tpu.matmul %17, %14, %cst_13 {dimension_numbers = #tpu.dot_dimension_numbers<[1], [0], [0], [1], [0, 0, 1, 1], [], []>} : vector<2x32xf32>, vector<32x128xf32>, vector<2x128xf32> -> vector<2x128xf32>
    %20 = arith.addf %6, %19 : vector<2x128xf32>
    %21 = vector.extract_strided_slice %20 {offsets = [0, 0], sizes = [2, 32], strides = [1, 1]} : vector<2x128xf32> to vector<2x32xf32>
    %22 = arith.negf %21 : vector<2x32xf32>
    %23 = math.exp %22 : vector<2x32xf32>
    %cst_14 = arith.constant 1.000000e+00 : f32
    %24 = vector.broadcast %cst_14 : f32 to vector<2x32xf32>
    %25 = arith.addf %24, %23 : vector<2x32xf32>
    %26 = arith.divf %24, %25 : vector<2x32xf32>
    %27 = vector.extract_strided_slice %20 {offsets = [0, 32], sizes = [2, 32], strides = [1, 1]} : vector<2x128xf32> to vector<2x32xf32>
    %28 = arith.negf %27 : vector<2x32xf32>
    %29 = math.exp %28 : vector<2x32xf32>
    %cst_15 = arith.constant 1.000000e+00 : f32
    %30 = vector.broadcast %cst_15 : f32 to vector<2x32xf32>
    %31 = arith.addf %30, %29 : vector<2x32xf32>
    %32 = arith.divf %30, %31 : vector<2x32xf32>
    %33 = vector.extract_strided_slice %20 {offsets = [0, 64], sizes = [2, 32], strides = [1, 1]} : vector<2x128xf32> to vector<2x32xf32>
    %34 = math.tanh %33 : vector<2x32xf32>
    %35 = vector.extract_strided_slice %20 {offsets = [0, 96], sizes = [2, 32], strides = [1, 1]} : vector<2x128xf32> to vector<2x32xf32>
    %36 = arith.negf %35 : vector<2x32xf32>
    %37 = math.exp %36 : vector<2x32xf32>
    %cst_16 = arith.constant 1.000000e+00 : f32
    %38 = vector.broadcast %cst_16 : f32 to vector<2x32xf32>
    %39 = arith.addf %38, %37 : vector<2x32xf32>
    %40 = arith.divf %38, %39 : vector<2x32xf32>
    %41 = arith.mulf %32, %18 : vector<2x32xf32>
    %42 = arith.mulf %26, %34 : vector<2x32xf32>
    %43 = arith.addf %41, %42 : vector<2x32xf32>
    %44 = math.tanh %43 : vector<2x32xf32>
    %45 = arith.mulf %40, %44 : vector<2x32xf32>
    %cst_17 = arith.constant dense<0.000000e+00> : vector<2x128xf32>
    %46 = tpu.matmul %45, %15, %cst_17 {dimension_numbers = #tpu.dot_dimension_numbers<[1], [0], [0], [1], [0, 0, 1, 1], [], []>} : vector<2x32xf32>, vector<32x128xf32>, vector<2x128xf32> -> vector<2x128xf32>
    %47 = vector.broadcast %16 : vector<1x128xf32> to vector<2x128xf32>
    %48 = arith.addf %46, %47 : vector<2x128xf32>
    %cst_18 = arith.constant dense<0.000000e+00> : vector<2x128xf32>
    %49 = tpu.matmul %45, %14, %cst_18 {dimension_numbers = #tpu.dot_dimension_numbers<[1], [0], [0], [1], [0, 0, 1, 1], [], []>} : vector<2x32xf32>, vector<32x128xf32>, vector<2x128xf32> -> vector<2x128xf32>
    %50 = arith.addf %7, %49 : vector<2x128xf32>
    %51 = vector.extract_strided_slice %50 {offsets = [0, 0], sizes = [2, 32], strides = [1, 1]} : vector<2x128xf32> to vector<2x32xf32>
    %52 = arith.negf %51 : vector<2x32xf32>
    %53 = math.exp %52 : vector<2x32xf32>
    %cst_19 = arith.constant 1.000000e+00 : f32
    %54 = vector.broadcast %cst_19 : f32 to vector<2x32xf32>
    %55 = arith.addf %54, %53 : vector<2x32xf32>
    %56 = arith.divf %54, %55 : vector<2x32xf32>
    %57 = vector.extract_strided_slice %50 {offsets = [0, 32], sizes = [2, 32], strides = [1, 1]} : vector<2x128xf32> to vector<2x32xf32>
    %58 = arith.negf %57 : vector<2x32xf32>
    %59 = math.exp %58 : vector<2x32xf32>
    %cst_20 = arith.constant 1.000000e+00 : f32
    %60 = vector.broadcast %cst_20 : f32 to vector<2x32xf32>
    %61 = arith.addf %60, %59 : vector<2x32xf32>
    %62 = arith.divf %60, %61 : vector<2x32xf32>
    %63 = vector.extract_strided_slice %50 {offsets = [0, 64], sizes = [2, 32], strides = [1, 1]} : vector<2x128xf32> to vector<2x32xf32>
    %64 = math.tanh %63 : vector<2x32xf32>
    %65 = vector.extract_strided_slice %50 {offsets = [0, 96], sizes = [2, 32], strides = [1, 1]} : vector<2x128xf32> to vector<2x32xf32>
    %66 = arith.negf %65 : vector<2x32xf32>
    %67 = math.exp %66 : vector<2x32xf32>
    %cst_21 = arith.constant 1.000000e+00 : f32
    %68 = vector.broadcast %cst_21 : f32 to vector<2x32xf32>
    %69 = arith.addf %68, %67 : vector<2x32xf32>
    %70 = arith.divf %68, %69 : vector<2x32xf32>
    %71 = arith.mulf %62, %43 : vector<2x32xf32>
    %72 = arith.mulf %56, %64 : vector<2x32xf32>
    %73 = arith.addf %71, %72 : vector<2x32xf32>
    %74 = math.tanh %73 : vector<2x32xf32>
    %75 = arith.mulf %70, %74 : vector<2x32xf32>
    %cst_22 = arith.constant dense<0.000000e+00> : vector<2x128xf32>
    %76 = tpu.matmul %75, %15, %cst_22 {dimension_numbers = #tpu.dot_dimension_numbers<[1], [0], [0], [1], [0, 0, 1, 1], [], []>} : vector<2x32xf32>, vector<32x128xf32>, vector<2x128xf32> -> vector<2x128xf32>
    %77 = vector.broadcast %16 : vector<1x128xf32> to vector<2x128xf32>
    %78 = arith.addf %76, %77 : vector<2x128xf32>
    %cst_23 = arith.constant dense<0.000000e+00> : vector<2x128xf32>
    %79 = tpu.matmul %75, %14, %cst_23 {dimension_numbers = #tpu.dot_dimension_numbers<[1], [0], [0], [1], [0, 0, 1, 1], [], []>} : vector<2x32xf32>, vector<32x128xf32>, vector<2x128xf32> -> vector<2x128xf32>
    %80 = arith.addf %8, %79 : vector<2x128xf32>
    %81 = vector.extract_strided_slice %80 {offsets = [0, 0], sizes = [2, 32], strides = [1, 1]} : vector<2x128xf32> to vector<2x32xf32>
    %82 = arith.negf %81 : vector<2x32xf32>
    %83 = math.exp %82 : vector<2x32xf32>
    %cst_24 = arith.constant 1.000000e+00 : f32
    %84 = vector.broadcast %cst_24 : f32 to vector<2x32xf32>
    %85 = arith.addf %84, %83 : vector<2x32xf32>
    %86 = arith.divf %84, %85 : vector<2x32xf32>
    %87 = vector.extract_strided_slice %80 {offsets = [0, 32], sizes = [2, 32], strides = [1, 1]} : vector<2x128xf32> to vector<2x32xf32>
    %88 = arith.negf %87 : vector<2x32xf32>
    %89 = math.exp %88 : vector<2x32xf32>
    %cst_25 = arith.constant 1.000000e+00 : f32
    %90 = vector.broadcast %cst_25 : f32 to vector<2x32xf32>
    %91 = arith.addf %90, %89 : vector<2x32xf32>
    %92 = arith.divf %90, %91 : vector<2x32xf32>
    %93 = vector.extract_strided_slice %80 {offsets = [0, 64], sizes = [2, 32], strides = [1, 1]} : vector<2x128xf32> to vector<2x32xf32>
    %94 = math.tanh %93 : vector<2x32xf32>
    %95 = vector.extract_strided_slice %80 {offsets = [0, 96], sizes = [2, 32], strides = [1, 1]} : vector<2x128xf32> to vector<2x32xf32>
    %96 = arith.negf %95 : vector<2x32xf32>
    %97 = math.exp %96 : vector<2x32xf32>
    %cst_26 = arith.constant 1.000000e+00 : f32
    %98 = vector.broadcast %cst_26 : f32 to vector<2x32xf32>
    %99 = arith.addf %98, %97 : vector<2x32xf32>
    %100 = arith.divf %98, %99 : vector<2x32xf32>
    %101 = arith.mulf %92, %73 : vector<2x32xf32>
    %102 = arith.mulf %86, %94 : vector<2x32xf32>
    %103 = arith.addf %101, %102 : vector<2x32xf32>
    %104 = math.tanh %103 : vector<2x32xf32>
    %105 = arith.mulf %100, %104 : vector<2x32xf32>
    %cst_27 = arith.constant dense<0.000000e+00> : vector<2x128xf32>
    %106 = tpu.matmul %105, %15, %cst_27 {dimension_numbers = #tpu.dot_dimension_numbers<[1], [0], [0], [1], [0, 0, 1, 1], [], []>} : vector<2x32xf32>, vector<32x128xf32>, vector<2x128xf32> -> vector<2x128xf32>
    %107 = vector.broadcast %16 : vector<1x128xf32> to vector<2x128xf32>
    %108 = arith.addf %106, %107 : vector<2x128xf32>
    %cst_28 = arith.constant dense<0.000000e+00> : vector<2x128xf32>
    %109 = tpu.matmul %105, %14, %cst_28 {dimension_numbers = #tpu.dot_dimension_numbers<[1], [0], [0], [1], [0, 0, 1, 1], [], []>} : vector<2x32xf32>, vector<32x128xf32>, vector<2x128xf32> -> vector<2x128xf32>
    %110 = arith.addf %9, %109 : vector<2x128xf32>
    %111 = vector.extract_strided_slice %110 {offsets = [0, 0], sizes = [2, 32], strides = [1, 1]} : vector<2x128xf32> to vector<2x32xf32>
    %112 = arith.negf %111 : vector<2x32xf32>
    %113 = math.exp %112 : vector<2x32xf32>
    %cst_29 = arith.constant 1.000000e+00 : f32
    %114 = vector.broadcast %cst_29 : f32 to vector<2x32xf32>
    %115 = arith.addf %114, %113 : vector<2x32xf32>
    %116 = arith.divf %114, %115 : vector<2x32xf32>
    %117 = vector.extract_strided_slice %110 {offsets = [0, 32], sizes = [2, 32], strides = [1, 1]} : vector<2x128xf32> to vector<2x32xf32>
    %118 = arith.negf %117 : vector<2x32xf32>
    %119 = math.exp %118 : vector<2x32xf32>
    %cst_30 = arith.constant 1.000000e+00 : f32
    %120 = vector.broadcast %cst_30 : f32 to vector<2x32xf32>
    %121 = arith.addf %120, %119 : vector<2x32xf32>
    %122 = arith.divf %120, %121 : vector<2x32xf32>
    %123 = vector.extract_strided_slice %110 {offsets = [0, 64], sizes = [2, 32], strides = [1, 1]} : vector<2x128xf32> to vector<2x32xf32>
    %124 = math.tanh %123 : vector<2x32xf32>
    %125 = vector.extract_strided_slice %110 {offsets = [0, 96], sizes = [2, 32], strides = [1, 1]} : vector<2x128xf32> to vector<2x32xf32>
    %126 = arith.negf %125 : vector<2x32xf32>
    %127 = math.exp %126 : vector<2x32xf32>
    %cst_31 = arith.constant 1.000000e+00 : f32
    %128 = vector.broadcast %cst_31 : f32 to vector<2x32xf32>
    %129 = arith.addf %128, %127 : vector<2x32xf32>
    %130 = arith.divf %128, %129 : vector<2x32xf32>
    %131 = arith.mulf %122, %103 : vector<2x32xf32>
    %132 = arith.mulf %116, %124 : vector<2x32xf32>
    %133 = arith.addf %131, %132 : vector<2x32xf32>
    %134 = math.tanh %133 : vector<2x32xf32>
    %135 = arith.mulf %130, %134 : vector<2x32xf32>
    %cst_32 = arith.constant dense<0.000000e+00> : vector<2x128xf32>
    %136 = tpu.matmul %135, %15, %cst_32 {dimension_numbers = #tpu.dot_dimension_numbers<[1], [0], [0], [1], [0, 0, 1, 1], [], []>} : vector<2x32xf32>, vector<32x128xf32>, vector<2x128xf32> -> vector<2x128xf32>
    %137 = vector.broadcast %16 : vector<1x128xf32> to vector<2x128xf32>
    %138 = arith.addf %136, %137 : vector<2x128xf32>
    %cst_33 = arith.constant dense<0.000000e+00> : vector<2x128xf32>
    %139 = tpu.matmul %135, %14, %cst_33 {dimension_numbers = #tpu.dot_dimension_numbers<[1], [0], [0], [1], [0, 0, 1, 1], [], []>} : vector<2x32xf32>, vector<32x128xf32>, vector<2x128xf32> -> vector<2x128xf32>
    %140 = arith.addf %10, %139 : vector<2x128xf32>
    %141 = vector.extract_strided_slice %140 {offsets = [0, 0], sizes = [2, 32], strides = [1, 1]} : vector<2x128xf32> to vector<2x32xf32>
    %142 = arith.negf %141 : vector<2x32xf32>
    %143 = math.exp %142 : vector<2x32xf32>
    %cst_34 = arith.constant 1.000000e+00 : f32
    %144 = vector.broadcast %cst_34 : f32 to vector<2x32xf32>
    %145 = arith.addf %144, %143 : vector<2x32xf32>
    %146 = arith.divf %144, %145 : vector<2x32xf32>
    %147 = vector.extract_strided_slice %140 {offsets = [0, 32], sizes = [2, 32], strides = [1, 1]} : vector<2x128xf32> to vector<2x32xf32>
    %148 = arith.negf %147 : vector<2x32xf32>
    %149 = math.exp %148 : vector<2x32xf32>
    %cst_35 = arith.constant 1.000000e+00 : f32
    %150 = vector.broadcast %cst_35 : f32 to vector<2x32xf32>
    %151 = arith.addf %150, %149 : vector<2x32xf32>
    %152 = arith.divf %150, %151 : vector<2x32xf32>
    %153 = vector.extract_strided_slice %140 {offsets = [0, 64], sizes = [2, 32], strides = [1, 1]} : vector<2x128xf32> to vector<2x32xf32>
    %154 = math.tanh %153 : vector<2x32xf32>
    %155 = vector.extract_strided_slice %140 {offsets = [0, 96], sizes = [2, 32], strides = [1, 1]} : vector<2x128xf32> to vector<2x32xf32>
    %156 = arith.negf %155 : vector<2x32xf32>
    %157 = math.exp %156 : vector<2x32xf32>
    %cst_36 = arith.constant 1.000000e+00 : f32
    %158 = vector.broadcast %cst_36 : f32 to vector<2x32xf32>
    %159 = arith.addf %158, %157 : vector<2x32xf32>
    %160 = arith.divf %158, %159 : vector<2x32xf32>
    %161 = arith.mulf %152, %133 : vector<2x32xf32>
    %162 = arith.mulf %146, %154 : vector<2x32xf32>
    %163 = arith.addf %161, %162 : vector<2x32xf32>
    %164 = math.tanh %163 : vector<2x32xf32>
    %165 = arith.mulf %160, %164 : vector<2x32xf32>
    %cst_37 = arith.constant dense<0.000000e+00> : vector<2x128xf32>
    %166 = tpu.matmul %165, %15, %cst_37 {dimension_numbers = #tpu.dot_dimension_numbers<[1], [0], [0], [1], [0, 0, 1, 1], [], []>} : vector<2x32xf32>, vector<32x128xf32>, vector<2x128xf32> -> vector<2x128xf32>
    %167 = vector.broadcast %16 : vector<1x128xf32> to vector<2x128xf32>
    %168 = arith.addf %166, %167 : vector<2x128xf32>
    %cst_38 = arith.constant dense<0.000000e+00> : vector<2x128xf32>
    %169 = tpu.matmul %165, %14, %cst_38 {dimension_numbers = #tpu.dot_dimension_numbers<[1], [0], [0], [1], [0, 0, 1, 1], [], []>} : vector<2x32xf32>, vector<32x128xf32>, vector<2x128xf32> -> vector<2x128xf32>
    %170 = arith.addf %11, %169 : vector<2x128xf32>
    %171 = vector.extract_strided_slice %170 {offsets = [0, 0], sizes = [2, 32], strides = [1, 1]} : vector<2x128xf32> to vector<2x32xf32>
    %172 = arith.negf %171 : vector<2x32xf32>
    %173 = math.exp %172 : vector<2x32xf32>
    %cst_39 = arith.constant 1.000000e+00 : f32
    %174 = vector.broadcast %cst_39 : f32 to vector<2x32xf32>
    %175 = arith.addf %174, %173 : vector<2x32xf32>
    %176 = arith.divf %174, %175 : vector<2x32xf32>
    %177 = vector.extract_strided_slice %170 {offsets = [0, 32], sizes = [2, 32], strides = [1, 1]} : vector<2x128xf32> to vector<2x32xf32>
    %178 = arith.negf %177 : vector<2x32xf32>
    %179 = math.exp %178 : vector<2x32xf32>
    %cst_40 = arith.constant 1.000000e+00 : f32
    %180 = vector.broadcast %cst_40 : f32 to vector<2x32xf32>
    %181 = arith.addf %180, %179 : vector<2x32xf32>
    %182 = arith.divf %180, %181 : vector<2x32xf32>
    %183 = vector.extract_strided_slice %170 {offsets = [0, 64], sizes = [2, 32], strides = [1, 1]} : vector<2x128xf32> to vector<2x32xf32>
    %184 = math.tanh %183 : vector<2x32xf32>
    %185 = vector.extract_strided_slice %170 {offsets = [0, 96], sizes = [2, 32], strides = [1, 1]} : vector<2x128xf32> to vector<2x32xf32>
    %186 = arith.negf %185 : vector<2x32xf32>
    %187 = math.exp %186 : vector<2x32xf32>
    %cst_41 = arith.constant 1.000000e+00 : f32
    %188 = vector.broadcast %cst_41 : f32 to vector<2x32xf32>
    %189 = arith.addf %188, %187 : vector<2x32xf32>
    %190 = arith.divf %188, %189 : vector<2x32xf32>
    %191 = arith.mulf %182, %163 : vector<2x32xf32>
    %192 = arith.mulf %176, %184 : vector<2x32xf32>
    %193 = arith.addf %191, %192 : vector<2x32xf32>
    %194 = math.tanh %193 : vector<2x32xf32>
    %195 = arith.mulf %190, %194 : vector<2x32xf32>
    %cst_42 = arith.constant dense<0.000000e+00> : vector<2x128xf32>
    %196 = tpu.matmul %195, %15, %cst_42 {dimension_numbers = #tpu.dot_dimension_numbers<[1], [0], [0], [1], [0, 0, 1, 1], [], []>} : vector<2x32xf32>, vector<32x128xf32>, vector<2x128xf32> -> vector<2x128xf32>
    %197 = vector.broadcast %16 : vector<1x128xf32> to vector<2x128xf32>
    %198 = arith.addf %196, %197 : vector<2x128xf32>
    %cst_43 = arith.constant dense<0.000000e+00> : vector<2x128xf32>
    %199 = tpu.matmul %195, %14, %cst_43 {dimension_numbers = #tpu.dot_dimension_numbers<[1], [0], [0], [1], [0, 0, 1, 1], [], []>} : vector<2x32xf32>, vector<32x128xf32>, vector<2x128xf32> -> vector<2x128xf32>
    %200 = arith.addf %12, %199 : vector<2x128xf32>
    %201 = vector.extract_strided_slice %200 {offsets = [0, 0], sizes = [2, 32], strides = [1, 1]} : vector<2x128xf32> to vector<2x32xf32>
    %202 = arith.negf %201 : vector<2x32xf32>
    %203 = math.exp %202 : vector<2x32xf32>
    %cst_44 = arith.constant 1.000000e+00 : f32
    %204 = vector.broadcast %cst_44 : f32 to vector<2x32xf32>
    %205 = arith.addf %204, %203 : vector<2x32xf32>
    %206 = arith.divf %204, %205 : vector<2x32xf32>
    %207 = vector.extract_strided_slice %200 {offsets = [0, 32], sizes = [2, 32], strides = [1, 1]} : vector<2x128xf32> to vector<2x32xf32>
    %208 = arith.negf %207 : vector<2x32xf32>
    %209 = math.exp %208 : vector<2x32xf32>
    %cst_45 = arith.constant 1.000000e+00 : f32
    %210 = vector.broadcast %cst_45 : f32 to vector<2x32xf32>
    %211 = arith.addf %210, %209 : vector<2x32xf32>
    %212 = arith.divf %210, %211 : vector<2x32xf32>
    %213 = vector.extract_strided_slice %200 {offsets = [0, 64], sizes = [2, 32], strides = [1, 1]} : vector<2x128xf32> to vector<2x32xf32>
    %214 = math.tanh %213 : vector<2x32xf32>
    %215 = vector.extract_strided_slice %200 {offsets = [0, 96], sizes = [2, 32], strides = [1, 1]} : vector<2x128xf32> to vector<2x32xf32>
    %216 = arith.negf %215 : vector<2x32xf32>
    %217 = math.exp %216 : vector<2x32xf32>
    %cst_46 = arith.constant 1.000000e+00 : f32
    %218 = vector.broadcast %cst_46 : f32 to vector<2x32xf32>
    %219 = arith.addf %218, %217 : vector<2x32xf32>
    %220 = arith.divf %218, %219 : vector<2x32xf32>
    %221 = arith.mulf %212, %193 : vector<2x32xf32>
    %222 = arith.mulf %206, %214 : vector<2x32xf32>
    %223 = arith.addf %221, %222 : vector<2x32xf32>
    %224 = math.tanh %223 : vector<2x32xf32>
    %225 = arith.mulf %220, %224 : vector<2x32xf32>
    %cst_47 = arith.constant dense<0.000000e+00> : vector<2x128xf32>
    %226 = tpu.matmul %225, %15, %cst_47 {dimension_numbers = #tpu.dot_dimension_numbers<[1], [0], [0], [1], [0, 0, 1, 1], [], []>} : vector<2x32xf32>, vector<32x128xf32>, vector<2x128xf32> -> vector<2x128xf32>
    %227 = vector.broadcast %16 : vector<1x128xf32> to vector<2x128xf32>
    %228 = arith.addf %226, %227 : vector<2x128xf32>
    %cst_48 = arith.constant dense<0.000000e+00> : vector<2x128xf32>
    %229 = tpu.matmul %225, %14, %cst_48 {dimension_numbers = #tpu.dot_dimension_numbers<[1], [0], [0], [1], [0, 0, 1, 1], [], []>} : vector<2x32xf32>, vector<32x128xf32>, vector<2x128xf32> -> vector<2x128xf32>
    %230 = arith.addf %13, %229 : vector<2x128xf32>
    %231 = vector.extract_strided_slice %230 {offsets = [0, 0], sizes = [2, 32], strides = [1, 1]} : vector<2x128xf32> to vector<2x32xf32>
    %232 = arith.negf %231 : vector<2x32xf32>
    %233 = math.exp %232 : vector<2x32xf32>
    %cst_49 = arith.constant 1.000000e+00 : f32
    %234 = vector.broadcast %cst_49 : f32 to vector<2x32xf32>
    %235 = arith.addf %234, %233 : vector<2x32xf32>
    %236 = arith.divf %234, %235 : vector<2x32xf32>
    %237 = vector.extract_strided_slice %230 {offsets = [0, 32], sizes = [2, 32], strides = [1, 1]} : vector<2x128xf32> to vector<2x32xf32>
    %238 = arith.negf %237 : vector<2x32xf32>
    %239 = math.exp %238 : vector<2x32xf32>
    %cst_50 = arith.constant 1.000000e+00 : f32
    %240 = vector.broadcast %cst_50 : f32 to vector<2x32xf32>
    %241 = arith.addf %240, %239 : vector<2x32xf32>
    %242 = arith.divf %240, %241 : vector<2x32xf32>
    %243 = vector.extract_strided_slice %230 {offsets = [0, 64], sizes = [2, 32], strides = [1, 1]} : vector<2x128xf32> to vector<2x32xf32>
    %244 = math.tanh %243 : vector<2x32xf32>
    %245 = vector.extract_strided_slice %230 {offsets = [0, 96], sizes = [2, 32], strides = [1, 1]} : vector<2x128xf32> to vector<2x32xf32>
    %246 = arith.negf %245 : vector<2x32xf32>
    %247 = math.exp %246 : vector<2x32xf32>
    %cst_51 = arith.constant 1.000000e+00 : f32
    %248 = vector.broadcast %cst_51 : f32 to vector<2x32xf32>
    %249 = arith.addf %248, %247 : vector<2x32xf32>
    %250 = arith.divf %248, %249 : vector<2x32xf32>
    %251 = arith.mulf %242, %223 : vector<2x32xf32>
    %252 = arith.mulf %236, %244 : vector<2x32xf32>
    %253 = arith.addf %251, %252 : vector<2x32xf32>
    %254 = math.tanh %253 : vector<2x32xf32>
    %255 = arith.mulf %250, %254 : vector<2x32xf32>
    %cst_52 = arith.constant dense<0.000000e+00> : vector<2x128xf32>
    %256 = tpu.matmul %255, %15, %cst_52 {dimension_numbers = #tpu.dot_dimension_numbers<[1], [0], [0], [1], [0, 0, 1, 1], [], []>} : vector<2x32xf32>, vector<32x128xf32>, vector<2x128xf32> -> vector<2x128xf32>
    %257 = vector.broadcast %16 : vector<1x128xf32> to vector<2x128xf32>
    %258 = arith.addf %256, %257 : vector<2x128xf32>
    %c0_53 = arith.constant 0 : index
    %c0_54 = arith.constant 0 : index
    %259 = vector.load %arg5[%c0_53, %c0_54] : memref<32x128xf32, #tpu.memory_space<vmem>>, vector<32x128xf32>
    %cst_55 = arith.constant 0.000000e+00 : f32
    %260 = vector.broadcast %cst_55 : f32 to vector<2x32xf32>
    %cst_56 = arith.constant 0.000000e+00 : f32
    %261 = vector.broadcast %cst_56 : f32 to vector<2x32xf32>
    %cst_57 = arith.constant dense<0.000000e+00> : vector<2x128xf32>
    %262 = tpu.matmul %260, %259, %cst_57 {dimension_numbers = #tpu.dot_dimension_numbers<[1], [0], [0], [1], [0, 0, 1, 1], [], []>} : vector<2x32xf32>, vector<32x128xf32>, vector<2x128xf32> -> vector<2x128xf32>
    %263 = arith.addf %48, %262 : vector<2x128xf32>
    %264 = vector.extract_strided_slice %263 {offsets = [0, 0], sizes = [2, 32], strides = [1, 1]} : vector<2x128xf32> to vector<2x32xf32>
    %265 = arith.negf %264 : vector<2x32xf32>
    %266 = math.exp %265 : vector<2x32xf32>
    %cst_58 = arith.constant 1.000000e+00 : f32
    %267 = vector.broadcast %cst_58 : f32 to vector<2x32xf32>
    %268 = arith.addf %267, %266 : vector<2x32xf32>
    %269 = arith.divf %267, %268 : vector<2x32xf32>
    %270 = vector.extract_strided_slice %263 {offsets = [0, 32], sizes = [2, 32], strides = [1, 1]} : vector<2x128xf32> to vector<2x32xf32>
    %271 = arith.negf %270 : vector<2x32xf32>
    %272 = math.exp %271 : vector<2x32xf32>
    %cst_59 = arith.constant 1.000000e+00 : f32
    %273 = vector.broadcast %cst_59 : f32 to vector<2x32xf32>
    %274 = arith.addf %273, %272 : vector<2x32xf32>
    %275 = arith.divf %273, %274 : vector<2x32xf32>
    %276 = vector.extract_strided_slice %263 {offsets = [0, 64], sizes = [2, 32], strides = [1, 1]} : vector<2x128xf32> to vector<2x32xf32>
    %277 = math.tanh %276 : vector<2x32xf32>
    %278 = vector.extract_strided_slice %263 {offsets = [0, 96], sizes = [2, 32], strides = [1, 1]} : vector<2x128xf32> to vector<2x32xf32>
    %279 = arith.negf %278 : vector<2x32xf32>
    %280 = math.exp %279 : vector<2x32xf32>
    %cst_60 = arith.constant 1.000000e+00 : f32
    %281 = vector.broadcast %cst_60 : f32 to vector<2x32xf32>
    %282 = arith.addf %281, %280 : vector<2x32xf32>
    %283 = arith.divf %281, %282 : vector<2x32xf32>
    %284 = arith.mulf %275, %261 : vector<2x32xf32>
    %285 = arith.mulf %269, %277 : vector<2x32xf32>
    %286 = arith.addf %284, %285 : vector<2x32xf32>
    %287 = math.tanh %286 : vector<2x32xf32>
    %288 = arith.mulf %283, %287 : vector<2x32xf32>
    %cst_61 = arith.constant dense<0.000000e+00> : vector<2x128xf32>
    %289 = tpu.matmul %288, %259, %cst_61 {dimension_numbers = #tpu.dot_dimension_numbers<[1], [0], [0], [1], [0, 0, 1, 1], [], []>} : vector<2x32xf32>, vector<32x128xf32>, vector<2x128xf32> -> vector<2x128xf32>
    %290 = arith.addf %78, %289 : vector<2x128xf32>
    %291 = vector.extract_strided_slice %290 {offsets = [0, 0], sizes = [2, 32], strides = [1, 1]} : vector<2x128xf32> to vector<2x32xf32>
    %292 = arith.negf %291 : vector<2x32xf32>
    %293 = math.exp %292 : vector<2x32xf32>
    %cst_62 = arith.constant 1.000000e+00 : f32
    %294 = vector.broadcast %cst_62 : f32 to vector<2x32xf32>
    %295 = arith.addf %294, %293 : vector<2x32xf32>
    %296 = arith.divf %294, %295 : vector<2x32xf32>
    %297 = vector.extract_strided_slice %290 {offsets = [0, 32], sizes = [2, 32], strides = [1, 1]} : vector<2x128xf32> to vector<2x32xf32>
    %298 = arith.negf %297 : vector<2x32xf32>
    %299 = math.exp %298 : vector<2x32xf32>
    %cst_63 = arith.constant 1.000000e+00 : f32
    %300 = vector.broadcast %cst_63 : f32 to vector<2x32xf32>
    %301 = arith.addf %300, %299 : vector<2x32xf32>
    %302 = arith.divf %300, %301 : vector<2x32xf32>
    %303 = vector.extract_strided_slice %290 {offsets = [0, 64], sizes = [2, 32], strides = [1, 1]} : vector<2x128xf32> to vector<2x32xf32>
    %304 = math.tanh %303 : vector<2x32xf32>
    %305 = vector.extract_strided_slice %290 {offsets = [0, 96], sizes = [2, 32], strides = [1, 1]} : vector<2x128xf32> to vector<2x32xf32>
    %306 = arith.negf %305 : vector<2x32xf32>
    %307 = math.exp %306 : vector<2x32xf32>
    %cst_64 = arith.constant 1.000000e+00 : f32
    %308 = vector.broadcast %cst_64 : f32 to vector<2x32xf32>
    %309 = arith.addf %308, %307 : vector<2x32xf32>
    %310 = arith.divf %308, %309 : vector<2x32xf32>
    %311 = arith.mulf %302, %286 : vector<2x32xf32>
    %312 = arith.mulf %296, %304 : vector<2x32xf32>
    %313 = arith.addf %311, %312 : vector<2x32xf32>
    %314 = math.tanh %313 : vector<2x32xf32>
    %315 = arith.mulf %310, %314 : vector<2x32xf32>
    %cst_65 = arith.constant dense<0.000000e+00> : vector<2x128xf32>
    %316 = tpu.matmul %315, %259, %cst_65 {dimension_numbers = #tpu.dot_dimension_numbers<[1], [0], [0], [1], [0, 0, 1, 1], [], []>} : vector<2x32xf32>, vector<32x128xf32>, vector<2x128xf32> -> vector<2x128xf32>
    %317 = arith.addf %108, %316 : vector<2x128xf32>
    %318 = vector.extract_strided_slice %317 {offsets = [0, 0], sizes = [2, 32], strides = [1, 1]} : vector<2x128xf32> to vector<2x32xf32>
    %319 = arith.negf %318 : vector<2x32xf32>
    %320 = math.exp %319 : vector<2x32xf32>
    %cst_66 = arith.constant 1.000000e+00 : f32
    %321 = vector.broadcast %cst_66 : f32 to vector<2x32xf32>
    %322 = arith.addf %321, %320 : vector<2x32xf32>
    %323 = arith.divf %321, %322 : vector<2x32xf32>
    %324 = vector.extract_strided_slice %317 {offsets = [0, 32], sizes = [2, 32], strides = [1, 1]} : vector<2x128xf32> to vector<2x32xf32>
    %325 = arith.negf %324 : vector<2x32xf32>
    %326 = math.exp %325 : vector<2x32xf32>
    %cst_67 = arith.constant 1.000000e+00 : f32
    %327 = vector.broadcast %cst_67 : f32 to vector<2x32xf32>
    %328 = arith.addf %327, %326 : vector<2x32xf32>
    %329 = arith.divf %327, %328 : vector<2x32xf32>
    %330 = vector.extract_strided_slice %317 {offsets = [0, 64], sizes = [2, 32], strides = [1, 1]} : vector<2x128xf32> to vector<2x32xf32>
    %331 = math.tanh %330 : vector<2x32xf32>
    %332 = vector.extract_strided_slice %317 {offsets = [0, 96], sizes = [2, 32], strides = [1, 1]} : vector<2x128xf32> to vector<2x32xf32>
    %333 = arith.negf %332 : vector<2x32xf32>
    %334 = math.exp %333 : vector<2x32xf32>
    %cst_68 = arith.constant 1.000000e+00 : f32
    %335 = vector.broadcast %cst_68 : f32 to vector<2x32xf32>
    %336 = arith.addf %335, %334 : vector<2x32xf32>
    %337 = arith.divf %335, %336 : vector<2x32xf32>
    %338 = arith.mulf %329, %313 : vector<2x32xf32>
    %339 = arith.mulf %323, %331 : vector<2x32xf32>
    %340 = arith.addf %338, %339 : vector<2x32xf32>
    %341 = math.tanh %340 : vector<2x32xf32>
    %342 = arith.mulf %337, %341 : vector<2x32xf32>
    %cst_69 = arith.constant dense<0.000000e+00> : vector<2x128xf32>
    %343 = tpu.matmul %342, %259, %cst_69 {dimension_numbers = #tpu.dot_dimension_numbers<[1], [0], [0], [1], [0, 0, 1, 1], [], []>} : vector<2x32xf32>, vector<32x128xf32>, vector<2x128xf32> -> vector<2x128xf32>
    %344 = arith.addf %138, %343 : vector<2x128xf32>
    %345 = vector.extract_strided_slice %344 {offsets = [0, 0], sizes = [2, 32], strides = [1, 1]} : vector<2x128xf32> to vector<2x32xf32>
    %346 = arith.negf %345 : vector<2x32xf32>
    %347 = math.exp %346 : vector<2x32xf32>
    %cst_70 = arith.constant 1.000000e+00 : f32
    %348 = vector.broadcast %cst_70 : f32 to vector<2x32xf32>
    %349 = arith.addf %348, %347 : vector<2x32xf32>
    %350 = arith.divf %348, %349 : vector<2x32xf32>
    %351 = vector.extract_strided_slice %344 {offsets = [0, 32], sizes = [2, 32], strides = [1, 1]} : vector<2x128xf32> to vector<2x32xf32>
    %352 = arith.negf %351 : vector<2x32xf32>
    %353 = math.exp %352 : vector<2x32xf32>
    %cst_71 = arith.constant 1.000000e+00 : f32
    %354 = vector.broadcast %cst_71 : f32 to vector<2x32xf32>
    %355 = arith.addf %354, %353 : vector<2x32xf32>
    %356 = arith.divf %354, %355 : vector<2x32xf32>
    %357 = vector.extract_strided_slice %344 {offsets = [0, 64], sizes = [2, 32], strides = [1, 1]} : vector<2x128xf32> to vector<2x32xf32>
    %358 = math.tanh %357 : vector<2x32xf32>
    %359 = vector.extract_strided_slice %344 {offsets = [0, 96], sizes = [2, 32], strides = [1, 1]} : vector<2x128xf32> to vector<2x32xf32>
    %360 = arith.negf %359 : vector<2x32xf32>
    %361 = math.exp %360 : vector<2x32xf32>
    %cst_72 = arith.constant 1.000000e+00 : f32
    %362 = vector.broadcast %cst_72 : f32 to vector<2x32xf32>
    %363 = arith.addf %362, %361 : vector<2x32xf32>
    %364 = arith.divf %362, %363 : vector<2x32xf32>
    %365 = arith.mulf %356, %340 : vector<2x32xf32>
    %366 = arith.mulf %350, %358 : vector<2x32xf32>
    %367 = arith.addf %365, %366 : vector<2x32xf32>
    %368 = math.tanh %367 : vector<2x32xf32>
    %369 = arith.mulf %364, %368 : vector<2x32xf32>
    %cst_73 = arith.constant dense<0.000000e+00> : vector<2x128xf32>
    %370 = tpu.matmul %369, %259, %cst_73 {dimension_numbers = #tpu.dot_dimension_numbers<[1], [0], [0], [1], [0, 0, 1, 1], [], []>} : vector<2x32xf32>, vector<32x128xf32>, vector<2x128xf32> -> vector<2x128xf32>
    %371 = arith.addf %168, %370 : vector<2x128xf32>
    %372 = vector.extract_strided_slice %371 {offsets = [0, 0], sizes = [2, 32], strides = [1, 1]} : vector<2x128xf32> to vector<2x32xf32>
    %373 = arith.negf %372 : vector<2x32xf32>
    %374 = math.exp %373 : vector<2x32xf32>
    %cst_74 = arith.constant 1.000000e+00 : f32
    %375 = vector.broadcast %cst_74 : f32 to vector<2x32xf32>
    %376 = arith.addf %375, %374 : vector<2x32xf32>
    %377 = arith.divf %375, %376 : vector<2x32xf32>
    %378 = vector.extract_strided_slice %371 {offsets = [0, 32], sizes = [2, 32], strides = [1, 1]} : vector<2x128xf32> to vector<2x32xf32>
    %379 = arith.negf %378 : vector<2x32xf32>
    %380 = math.exp %379 : vector<2x32xf32>
    %cst_75 = arith.constant 1.000000e+00 : f32
    %381 = vector.broadcast %cst_75 : f32 to vector<2x32xf32>
    %382 = arith.addf %381, %380 : vector<2x32xf32>
    %383 = arith.divf %381, %382 : vector<2x32xf32>
    %384 = vector.extract_strided_slice %371 {offsets = [0, 64], sizes = [2, 32], strides = [1, 1]} : vector<2x128xf32> to vector<2x32xf32>
    %385 = math.tanh %384 : vector<2x32xf32>
    %386 = vector.extract_strided_slice %371 {offsets = [0, 96], sizes = [2, 32], strides = [1, 1]} : vector<2x128xf32> to vector<2x32xf32>
    %387 = arith.negf %386 : vector<2x32xf32>
    %388 = math.exp %387 : vector<2x32xf32>
    %cst_76 = arith.constant 1.000000e+00 : f32
    %389 = vector.broadcast %cst_76 : f32 to vector<2x32xf32>
    %390 = arith.addf %389, %388 : vector<2x32xf32>
    %391 = arith.divf %389, %390 : vector<2x32xf32>
    %392 = arith.mulf %383, %367 : vector<2x32xf32>
    %393 = arith.mulf %377, %385 : vector<2x32xf32>
    %394 = arith.addf %392, %393 : vector<2x32xf32>
    %395 = math.tanh %394 : vector<2x32xf32>
    %396 = arith.mulf %391, %395 : vector<2x32xf32>
    %cst_77 = arith.constant dense<0.000000e+00> : vector<2x128xf32>
    %397 = tpu.matmul %396, %259, %cst_77 {dimension_numbers = #tpu.dot_dimension_numbers<[1], [0], [0], [1], [0, 0, 1, 1], [], []>} : vector<2x32xf32>, vector<32x128xf32>, vector<2x128xf32> -> vector<2x128xf32>
    %398 = arith.addf %198, %397 : vector<2x128xf32>
    %399 = vector.extract_strided_slice %398 {offsets = [0, 0], sizes = [2, 32], strides = [1, 1]} : vector<2x128xf32> to vector<2x32xf32>
    %400 = arith.negf %399 : vector<2x32xf32>
    %401 = math.exp %400 : vector<2x32xf32>
    %cst_78 = arith.constant 1.000000e+00 : f32
    %402 = vector.broadcast %cst_78 : f32 to vector<2x32xf32>
    %403 = arith.addf %402, %401 : vector<2x32xf32>
    %404 = arith.divf %402, %403 : vector<2x32xf32>
    %405 = vector.extract_strided_slice %398 {offsets = [0, 32], sizes = [2, 32], strides = [1, 1]} : vector<2x128xf32> to vector<2x32xf32>
    %406 = arith.negf %405 : vector<2x32xf32>
    %407 = math.exp %406 : vector<2x32xf32>
    %cst_79 = arith.constant 1.000000e+00 : f32
    %408 = vector.broadcast %cst_79 : f32 to vector<2x32xf32>
    %409 = arith.addf %408, %407 : vector<2x32xf32>
    %410 = arith.divf %408, %409 : vector<2x32xf32>
    %411 = vector.extract_strided_slice %398 {offsets = [0, 64], sizes = [2, 32], strides = [1, 1]} : vector<2x128xf32> to vector<2x32xf32>
    %412 = math.tanh %411 : vector<2x32xf32>
    %413 = vector.extract_strided_slice %398 {offsets = [0, 96], sizes = [2, 32], strides = [1, 1]} : vector<2x128xf32> to vector<2x32xf32>
    %414 = arith.negf %413 : vector<2x32xf32>
    %415 = math.exp %414 : vector<2x32xf32>
    %cst_80 = arith.constant 1.000000e+00 : f32
    %416 = vector.broadcast %cst_80 : f32 to vector<2x32xf32>
    %417 = arith.addf %416, %415 : vector<2x32xf32>
    %418 = arith.divf %416, %417 : vector<2x32xf32>
    %419 = arith.mulf %410, %394 : vector<2x32xf32>
    %420 = arith.mulf %404, %412 : vector<2x32xf32>
    %421 = arith.addf %419, %420 : vector<2x32xf32>
    %422 = math.tanh %421 : vector<2x32xf32>
    %423 = arith.mulf %418, %422 : vector<2x32xf32>
    %cst_81 = arith.constant dense<0.000000e+00> : vector<2x128xf32>
    %424 = tpu.matmul %423, %259, %cst_81 {dimension_numbers = #tpu.dot_dimension_numbers<[1], [0], [0], [1], [0, 0, 1, 1], [], []>} : vector<2x32xf32>, vector<32x128xf32>, vector<2x128xf32> -> vector<2x128xf32>
    %425 = arith.addf %228, %424 : vector<2x128xf32>
    %426 = vector.extract_strided_slice %425 {offsets = [0, 0], sizes = [2, 32], strides = [1, 1]} : vector<2x128xf32> to vector<2x32xf32>
    %427 = arith.negf %426 : vector<2x32xf32>
    %428 = math.exp %427 : vector<2x32xf32>
    %cst_82 = arith.constant 1.000000e+00 : f32
    %429 = vector.broadcast %cst_82 : f32 to vector<2x32xf32>
    %430 = arith.addf %429, %428 : vector<2x32xf32>
    %431 = arith.divf %429, %430 : vector<2x32xf32>
    %432 = vector.extract_strided_slice %425 {offsets = [0, 32], sizes = [2, 32], strides = [1, 1]} : vector<2x128xf32> to vector<2x32xf32>
    %433 = arith.negf %432 : vector<2x32xf32>
    %434 = math.exp %433 : vector<2x32xf32>
    %cst_83 = arith.constant 1.000000e+00 : f32
    %435 = vector.broadcast %cst_83 : f32 to vector<2x32xf32>
    %436 = arith.addf %435, %434 : vector<2x32xf32>
    %437 = arith.divf %435, %436 : vector<2x32xf32>
    %438 = vector.extract_strided_slice %425 {offsets = [0, 64], sizes = [2, 32], strides = [1, 1]} : vector<2x128xf32> to vector<2x32xf32>
    %439 = math.tanh %438 : vector<2x32xf32>
    %440 = vector.extract_strided_slice %425 {offsets = [0, 96], sizes = [2, 32], strides = [1, 1]} : vector<2x128xf32> to vector<2x32xf32>
    %441 = arith.negf %440 : vector<2x32xf32>
    %442 = math.exp %441 : vector<2x32xf32>
    %cst_84 = arith.constant 1.000000e+00 : f32
    %443 = vector.broadcast %cst_84 : f32 to vector<2x32xf32>
    %444 = arith.addf %443, %442 : vector<2x32xf32>
    %445 = arith.divf %443, %444 : vector<2x32xf32>
    %446 = arith.mulf %437, %421 : vector<2x32xf32>
    %447 = arith.mulf %431, %439 : vector<2x32xf32>
    %448 = arith.addf %446, %447 : vector<2x32xf32>
    %449 = math.tanh %448 : vector<2x32xf32>
    %450 = arith.mulf %445, %449 : vector<2x32xf32>
    %cst_85 = arith.constant dense<0.000000e+00> : vector<2x128xf32>
    %451 = tpu.matmul %450, %259, %cst_85 {dimension_numbers = #tpu.dot_dimension_numbers<[1], [0], [0], [1], [0, 0, 1, 1], [], []>} : vector<2x32xf32>, vector<32x128xf32>, vector<2x128xf32> -> vector<2x128xf32>
    %452 = arith.addf %258, %451 : vector<2x128xf32>
    %453 = vector.extract_strided_slice %452 {offsets = [0, 0], sizes = [2, 32], strides = [1, 1]} : vector<2x128xf32> to vector<2x32xf32>
    %454 = arith.negf %453 : vector<2x32xf32>
    %455 = math.exp %454 : vector<2x32xf32>
    %cst_86 = arith.constant 1.000000e+00 : f32
    %456 = vector.broadcast %cst_86 : f32 to vector<2x32xf32>
    %457 = arith.addf %456, %455 : vector<2x32xf32>
    %458 = arith.divf %456, %457 : vector<2x32xf32>
    %459 = vector.extract_strided_slice %452 {offsets = [0, 32], sizes = [2, 32], strides = [1, 1]} : vector<2x128xf32> to vector<2x32xf32>
    %460 = arith.negf %459 : vector<2x32xf32>
    %461 = math.exp %460 : vector<2x32xf32>
    %cst_87 = arith.constant 1.000000e+00 : f32
    %462 = vector.broadcast %cst_87 : f32 to vector<2x32xf32>
    %463 = arith.addf %462, %461 : vector<2x32xf32>
    %464 = arith.divf %462, %463 : vector<2x32xf32>
    %465 = vector.extract_strided_slice %452 {offsets = [0, 64], sizes = [2, 32], strides = [1, 1]} : vector<2x128xf32> to vector<2x32xf32>
    %466 = math.tanh %465 : vector<2x32xf32>
    %467 = vector.extract_strided_slice %452 {offsets = [0, 96], sizes = [2, 32], strides = [1, 1]} : vector<2x128xf32> to vector<2x32xf32>
    %468 = arith.negf %467 : vector<2x32xf32>
    %469 = math.exp %468 : vector<2x32xf32>
    %cst_88 = arith.constant 1.000000e+00 : f32
    %470 = vector.broadcast %cst_88 : f32 to vector<2x32xf32>
    %471 = arith.addf %470, %469 : vector<2x32xf32>
    %472 = arith.divf %470, %471 : vector<2x32xf32>
    %473 = arith.mulf %464, %448 : vector<2x32xf32>
    %474 = arith.mulf %458, %466 : vector<2x32xf32>
    %475 = arith.addf %473, %474 : vector<2x32xf32>
    %476 = math.tanh %475 : vector<2x32xf32>
    %477 = arith.mulf %472, %476 : vector<2x32xf32>
    %c0_89 = arith.constant 0 : index
    %c0_90 = arith.constant 0 : index
    %478 = vector.load %arg7[%c0_89, %c0_90] : memref<32x3xf32, #tpu.memory_space<vmem>>, vector<32x3xf32>
    %cst_91 = arith.constant dense<0.000000e+00> : vector<2x3xf32>
    %479 = tpu.matmul %477, %478, %cst_91 {dimension_numbers = #tpu.dot_dimension_numbers<[1], [0], [0], [1], [0, 0, 1, 1], [], []>} : vector<2x32xf32>, vector<32x3xf32>, vector<2x3xf32> -> vector<2x3xf32>
    %c0_92 = arith.constant 0 : index
    %c0_93 = arith.constant 0 : index
    %480 = vector.load %arg8[%c0_92, %c0_93] : memref<1x3xf32, #tpu.memory_space<vmem>>, vector<1x3xf32>
    %481 = vector.broadcast %480 : vector<1x3xf32> to vector<2x3xf32>
    %482 = arith.addf %479, %481 : vector<2x3xf32>
    %c0_94 = arith.constant 0 : index
    %c0_95 = arith.constant 0 : index
    %483 = vector.load %arg9[%c0_94, %c0_95] : memref<2x3xf32, #tpu.memory_space<vmem>>, vector<2x3xf32>
    tpu.vector_store %arg9[%c0_94, %c0_95], %482 {strides = array<i32>} : memref<2x3xf32, #tpu.memory_space<vmem>>, vector<2x3xf32>,
    return
  }
}

</mosaic_0001>

<llo_original>
// kernel: tpu_custom_call.1
$region0: #{tpu_custom_call.1}
  #allocation0 [shape = 'u32[]', space=smem, size = 0x4, offset = 0x4, fixed_abs, tag = 'smem constant byte address 0x4 - core index']
  #allocation1 [shape = 'u32[144,128]{1,0:T(1,128)}', space=vmem, size = 0x12000, scoped, tag = 'internal scratch']
  %s0 = inlined_call_operand.vmem [shape: f32[16,4], index: 0, kind: input, shape index: {}]
  %s1 = inlined_call_operand.hbm [shape: f32[4,128], index: 1, kind: input, shape index: {}]
  %s2 = inlined_call_operand.vmem [shape: f32[32,128], index: 2, kind: input, shape index: {}]
  %s3 = inlined_call_operand.vmem [shape: f32[1,128], index: 3, kind: input, shape index: {}]
  %s4 = inlined_call_operand.vmem [shape: f32[32,128], index: 4, kind: input, shape index: {}]
  %s5 = inlined_call_operand.hbm [shape: f32[32,128], index: 5, kind: input, shape index: {}]
  %s6 = inlined_call_operand.vmem [shape: f32[1,128], index: 6, kind: input, shape index: {}]
  %s7 = inlined_call_operand.vmem [shape: f32[32,3], index: 7, kind: input, shape index: {}]
  %s8 = inlined_call_operand.vmem [shape: f32[1,3], index: 8, kind: input, shape index: {}]
  %s9 = inlined_call_operand.hbm [shape: f32[2,3], index: 9, kind: output, shape index: {}]
  %s10 = sld [smem:[#allocation0]]
  $region54: #{tpu_custom_call.1} parent=0
    _
  %s12 = ssub.s32 1, %s10
  %s13 = scalar_select 0, %s12, %s10
  $region1: #{tpu_custom_call.1} parent=0
    #allocation2 [shape = 'u8[2048]{0}', space=vmem, size = 0x800, scoped, tag = 'input window, operand 1, single buffered']
    #allocation3 [shape = 's32[1]{0}', space=sflag, size = 0x4, scoped, tag = 'scoped memory for tpu_custom_call.1']
    #allocation4 [shape = 's32[1]{0}', space=sflag, size = 0x4, scoped, tag = 'scoped memory for tpu_custom_call.1']
    #allocation5 [shape = 'u8[16384]{0}', space=vmem, size = 0x4000, scoped, tag = 'input window, operand 5, single buffered']
    #allocation6 [shape = 's32[1]{0}', space=sflag, size = 0x4, scoped, tag = 'scoped memory for tpu_custom_call.1']
    #allocation7 [shape = 'u8[1024]{0}', space=vmem, size = 0x400, scoped, tag = 'output window, operand 0, single buffered']
    %14 = vsyncpa [#allocation3], 0
    %15 = vsyncpa [#allocation6], 0
    %16 = vsyncpa [#allocation4], 0
    // Predicated region
    $region2: #{tpu_custom_call.1} parent=1 // pred_check
      _
    $region3: #{tpu_custom_call.1} parent=1 // pred_check_branch
      %18 = sbr.rel (0) target = $region5
    $region4: #{tpu_custom_call.1} parent=1 // pred_region
      _
    $region5: #{tpu_custom_call.1} parent=1 // pred_fallthru
      _
    // Predicated region
    $region6: #{tpu_custom_call.1} parent=1 // pred_check
      _
    $region7: #{tpu_custom_call.1} parent=1 // pred_check_branch
      %20 = sbr.rel (0) target = $region9
    $region8: #{tpu_custom_call.1} parent=1 // pred_region
      %s22 = ssub.s32 64, 64
      %23 = vsyncadd [#allocation3], %s22
      %s25 = sshll.u32 [#allocation2], 4
      %s26 = int_to_ptr.vmem [resolvable:$true] %s25
      %28 = dma.hbm_to_vmem [thread:$0]  %s1, 64, %s26, [#allocation3]
    $region9: #{tpu_custom_call.1} parent=1 // pred_fallthru
      _
    // Predicated region
    $region10: #{tpu_custom_call.1} parent=1 // pred_check
      _
    $region11: #{tpu_custom_call.1} parent=1 // pred_check_branch
      %30 = sbr.rel (0) target = $region13
    $region12: #{tpu_custom_call.1} parent=1 // pred_region
      _
    $region13: #{tpu_custom_call.1} parent=1 // pred_fallthru
      _
    // Predicated region
    $region14: #{tpu_custom_call.1} parent=1 // pred_check
      _
    $region15: #{tpu_custom_call.1} parent=1 // pred_check_branch
      %32 = sbr.rel (0) target = $region17
    $region16: #{tpu_custom_call.1} parent=1 // pred_region
      _
    $region17: #{tpu_custom_call.1} parent=1 // pred_fallthru
      _
    // Predicated region
    $region18: #{tpu_custom_call.1} parent=1 // pred_check
      _
    $region19: #{tpu_custom_call.1} parent=1 // pred_check_branch
      %34 = sbr.rel (0) target = $region21
    $region20: #{tpu_custom_call.1} parent=1 // pred_region
      _
    $region21: #{tpu_custom_call.1} parent=1 // pred_fallthru
      _
    // Predicated region
    $region22: #{tpu_custom_call.1} parent=1 // pred_check
      _
    $region23: #{tpu_custom_call.1} parent=1 // pred_check_branch
      %36 = sbr.rel (0) target = $region25
    $region24: #{tpu_custom_call.1} parent=1 // pred_region
      %s38 = ssub.s32 512, 512
      %39 = vsyncadd [#allocation6], %s38
      %s40 = sshll.u32 [#allocation5], 4
      %s41 = int_to_ptr.vmem [resolvable:$true] %s40
      %46 = dma.hbm_to_vmem [thread:$0]  %s5, 512, %s41, [#allocation6], 128, 128, 8
    $region25: #{tpu_custom_call.1} parent=1 // pred_fallthru
      _
    // Predicated region
    $region26: #{tpu_custom_call.1} parent=1 // pred_check
      _
    $region27: #{tpu_custom_call.1} parent=1 // pred_check_branch
      %48 = sbr.rel (0) target = $region29
    $region28: #{tpu_custom_call.1} parent=1 // pred_region
      _
    $region29: #{tpu_custom_call.1} parent=1 // pred_fallthru
      _
    // Predicated region
    $region30: #{tpu_custom_call.1} parent=1 // pred_check
      _
    $region31: #{tpu_custom_call.1} parent=1 // pred_check_branch
      %50 = sbr.rel (0) target = $region33
    $region32: #{tpu_custom_call.1} parent=1 // pred_region
      _
    $region33: #{tpu_custom_call.1} parent=1 // pred_fallthru
      _
    // Predicated region
    $region34: #{tpu_custom_call.1} parent=1 // pred_check
      _
    $region35: #{tpu_custom_call.1} parent=1 // pred_check_branch
      %52 = sbr.rel (0) target = $region37
    $region36: #{tpu_custom_call.1} parent=1 // pred_region
      _
    $region37: #{tpu_custom_call.1} parent=1 // pred_fallthru
      _
    // Predicated region
    $region38: #{tpu_custom_call.1} parent=1 // pred_check
      _
    $region39: #{tpu_custom_call.1} parent=1 // pred_check_branch
      %54 = sbr.rel (0) target = $region41
    $region40: #{tpu_custom_call.1} parent=1 // pred_region
      %55 = dma.done [#allocation3], 64
    $region41: #{tpu_custom_call.1} parent=1 // pred_fallthru
      _
    // Predicated region
    $region42: #{tpu_custom_call.1} parent=1 // pred_check
      _
    $region43: #{tpu_custom_call.1} parent=1 // pred_check_branch
      %57 = sbr.rel (0) target = $region45
    $region44: #{tpu_custom_call.1} parent=1 // pred_region
      %58 = dma.done [#allocation6], 512
    $region45: #{tpu_custom_call.1} parent=1 // pred_fallthru
      _
    %v59 = vld [vmem:[%s0] sm:$0xff]
    %v60 = vld [vmem:[%s0 + $0x8] sm:$0xff]
    %v61 = vld [vmem:[#allocation2] sm:$0xf]
    %v62 = vld [vmem:[%s3] sm:$0x1]
    %v64 = vlaneseq
    %v65 = vshrl.u32 %v64, 7
    %v66 = vsub.s32 0, %v65
    %v67 = vrot.slane %v62, %v66
    %vm69 = vcmask 31744
    %v71 = vsel %vm69, %v59, 0
    %v74 = vsel %vm69, %v60, 0
    %vm76 = vcmask 1043456
    %v78 = vsel %vm76, %v61, 0
    %80 = vmatprep.subr.mxu0 0.0
    %81 = vmatpush1.msra.mxu0 %v78
    %82 = vmatprep.subr.mxu0 0.0
    %83 = vmatpush1.msra.mxu0 0.0
    %84 = vmatprep.subr.mxu0 0.0
    %85 = vmatpush1.msra.mxu0 0.0
    %86 = vmatprep.subr.mxu0 0.0
    %87 = vmatpush1.msra.mxu0 0.0
    %88 = vmatprep.subr.mxu0 0.0
    %89 = vmatpush1.msra.mxu0 0.0
    %90 = vmatprep.subr.mxu0 0.0
    %91 = vmatpush1.msra.mxu0 0.0
    %92 = vmatprep.subr.mxu0 0.0
    %93 = vmatpush1.msra.mxu0 0.0
    %94 = vmatprep.subr.mxu0 0.0
    %95 = vmatpush1.msra.mxu0 0.0
    %96 = vmatprep.subr.mxu0 0.0
    %97 = vmatpush1.msra.mxu0 0.0
    %98 = vmatprep.subr.mxu0 0.0
    %99 = vmatpush1.msra.mxu0 0.0
    %100 = vmatprep.subr.mxu0 0.0
    %101 = vmatpush1.msra.mxu0 0.0
    %102 = vmatprep.subr.mxu0 0.0
    %103 = vmatpush1.msra.mxu0 0.0
    %104 = vmatprep.subr.mxu0 0.0
    %105 = vmatpush1.msra.mxu0 0.0
    %106 = vmatprep.subr.mxu0 0.0
    %107 = vmatpush1.msra.mxu0 0.0
    %108 = vmatprep.subr.mxu0 0.0
    %109 = vmatpush1.msra.mxu0 0.0
    %110 = vmatprep.subr.mxu0 0.0
    %111 = vmatpush1.msra.mxu0 0.0
    %112 = vmatprep.subr.mxu0 0.0
    %113 = vmatpush1.msra.mxu0 0.0
    %114 = vmatprep.subr.mxu0 0.0
    %115 = vmatpush1.msra.mxu0 0.0
    %116 = vmatprep.subr.mxu0 0.0
    %117 = vmatpush1.msra.mxu0 0.0
    %118 = vmatprep.subr.mxu0 0.0
    %119 = vmatpush1.msra.mxu0 0.0
    %120 = vmatprep.subr.mxu0 0.0
    %121 = vmatpush1.msra.mxu0 0.0
    %122 = vmatprep.subr.mxu0 0.0
    %123 = vmatpush1.msra.mxu0 0.0
    %124 = vmatprep.subr.mxu0 0.0
    %125 = vmatpush1.msra.mxu0 0.0
    %126 = vmatprep.subr.mxu0 0.0
    %127 = vmatpush1.msra.mxu0 0.0
    %128 = vmatprep.subr.mxu0 0.0
    %129 = vmatpush1.msra.mxu0 0.0
    %130 = vmatprep.subr.mxu0 0.0
    %131 = vmatpush1.msra.mxu0 0.0
    %132 = vmatprep.subr.mxu0 0.0
    %133 = vmatpush1.msra.mxu0 0.0
    %134 = vmatprep.subr.mxu0 0.0
    %135 = vmatpush1.msra.mxu0 0.0
    %136 = vmatprep.subr.mxu0 0.0
    %137 = vmatpush1.msra.mxu0 0.0
    %138 = vmatprep.subr.mxu0 0.0
    %139 = vmatpush1.msra.mxu0 0.0
    %140 = vmatprep.subr.mxu0 0.0
    %141 = vmatpush1.msra.mxu0 0.0
    %142 = vmatprep.subr.mxu0 0.0
    %143 = vmatpush1.msra.mxu0 0.0
    %144 = vmatprep.mubr.f32.mxu0 0.0
    %145 = vmatmul.mubr.f32.gmra.mrb[0].mxu0 %v71
    %v146 = vpop.f32.mrb[0].mxu0
    %v147 = vadd.f32 %v67, %v146
    %v148 = vpop.f32.mrb[0].mxu0
    %149 = vmatprep.mubr.f32.mxu0 0.0
    %150 = vmatmul.mubr.f32.gmra.mrb[0].mxu0 %v74
    %v151 = vpop.f32.mrb[0].mxu0
    %v152 = vadd.f32 %v67, %v151
    %v153 = vpop.f32.mrb[0].mxu0
    %154 = vdwg.mxu0
    %v155 = vld [vmem:[%s2] sm:$0xff]
    %v156 = vld [vmem:[%s2 + $0x8] sm:$0xff]
    %v157 = vld [vmem:[%s2 + $0x10] sm:$0xff]
    %v158 = vld [vmem:[%s2 + $0x18] sm:$0xff]
    %v159 = vld [vmem:[%s4] sm:$0xff]
    %v160 = vld [vmem:[%s4 + $0x8] sm:$0xff]
    %v161 = vld [vmem:[%s4 + $0x10] sm:$0xff]
    %v162 = vld [vmem:[%s4 + $0x18] sm:$0xff]
    %v163 = vld [vmem:[%s6] sm:$0x1]
    %vm164 = vcmask 261120
    %v166 = vsel %vm164, 0.0, 0
    %168 = vmatprep.subr.mxu0 0.0
    %169 = vmatpush1.msra.mxu0 %v155
    %170 = vmatprep.subr.mxu0 0.0
    %171 = vmatpush1.msra.mxu0 %v156
    %172 = vmatprep.subr.mxu0 0.0
    %173 = vmatpush1.msra.mxu0 %v157
    %174 = vmatprep.subr.mxu0 0.0
    %175 = vmatpush1.msra.mxu0 %v158
    %176 = vmatprep.subr.mxu0 0.0
    %177 = vmatpush1.msra.mxu0 0.0
    %178 = vmatprep.subr.mxu0 0.0
    %179 = vmatpush1.msra.mxu0 0.0
    %180 = vmatprep.subr.mxu0 0.0
    %181 = vmatpush1.msra.mxu0 0.0
    %182 = vmatprep.subr.mxu0 0.0
    %183 = vmatpush1.msra.mxu0 0.0
    %184 = vmatprep.subr.mxu0 0.0
    %185 = vmatpush1.msra.mxu0 0.0
    %186 = vmatprep.subr.mxu0 0.0
    %187 = vmatpush1.msra.mxu0 0.0
    %188 = vmatprep.subr.mxu0 0.0
    %189 = vmatpush1.msra.mxu0 0.0
    %190 = vmatprep.subr.mxu0 0.0
    %191 = vmatpush1.msra.mxu0 0.0
    %192 = vmatprep.subr.mxu0 0.0
    %193 = vmatpush1.msra.mxu0 0.0
    %194 = vmatprep.subr.mxu0 0.0
    %195 = vmatpush1.msra.mxu0 0.0
    %196 = vmatprep.subr.mxu0 0.0
    %197 = vmatpush1.msra.mxu0 0.0
    %198 = vmatprep.subr.mxu0 0.0
    %199 = vmatpush1.msra.mxu0 0.0
    %200 = vmatprep.subr.mxu0 0.0
    %201 = vmatpush1.msra.mxu0 0.0
    %202 = vmatprep.subr.mxu0 0.0
    %203 = vmatpush1.msra.mxu0 0.0
    %204 = vmatprep.subr.mxu0 0.0
    %205 = vmatpush1.msra.mxu0 0.0
    %206 = vmatprep.subr.mxu0 0.0
    %207 = vmatpush1.msra.mxu0 0.0
    %208 = vmatprep.subr.mxu0 0.0
    %209 = vmatpush1.msra.mxu0 0.0
    %210 = vmatprep.subr.mxu0 0.0
    %211 = vmatpush1.msra.mxu0 0.0
    %212 = vmatprep.subr.mxu0 0.0
    %213 = vmatpush1.msra.mxu0 0.0
    %214 = vmatprep.subr.mxu0 0.0
    %215 = vmatpush1.msra.mxu0 0.0
    %216 = vmatprep.subr.mxu0 0.0
    %217 = vmatpush1.msra.mxu0 0.0
    %218 = vmatprep.subr.mxu0 0.0
    %219 = vmatpush1.msra.mxu0 0.0
    %220 = vmatprep.subr.mxu0 0.0
    %221 = vmatpush1.msra.mxu0 0.0
    %222 = vmatprep.subr.mxu0 0.0
    %223 = vmatpush1.msra.mxu0 0.0
    %224 = vmatprep.subr.mxu0 0.0
    %225 = vmatpush1.msra.mxu0 0.0
    %226 = vmatprep.subr.mxu0 0.0
    %227 = vmatpush1.msra.mxu0 0.0
    %228 = vmatprep.subr.mxu0 0.0
    %229 = vmatpush1.msra.mxu0 0.0
    %230 = vmatprep.subr.mxu0 0.0
    %231 = vmatpush1.msra.mxu0 0.0
    %232 = vmatprep.mubr.f32.mxu0 0.0
    %233 = vmatmul.mubr.f32.gmra.mrb[0].mxu0 %v166
    %v234 = vpop.f32.mrb[0].mxu0
    %v235 = vadd.f32 0.0, %v234
    %v236 = vpop.f32.mrb[0].mxu0
    %237 = vdwg.mxu0
    %v238 = vadd.f32 %v147, %v235
    %v239 = vxor.u32 %v238, 2147483648
    %v240 = vmul.f32 %v239, 1.442695
    %v241 = vpow.pop %v240
    %v242 = vadd.f32 %v241, 1.0
    %v243 = vrcp.pop %v242
    %v244 = vmul.f32 1.0, %v243
    %v245 = vtanh.pop %v238
    %v246 = vmul.f32 %v244, 0.0
    %248 = vrot.lane.b32.xlu0 %v245, 64
    %v249 = vpop.permute.xlu0 %248
    %v251 = vmul.f32 %v244, %v249
    %253 = vrot.lane.b32.xlu0 %v251, 32
    %v254 = vpop.permute.xlu0 %253
    %v256 = vadd.f32 %v246, %v254
    %v257 = vtanh.pop %v256
    %259 = vrot.lane.b32.xlu0 %v257, 64
    %v260 = vpop.permute.xlu0 %259
    %v262 = vmul.f32 %v244, %v260
    %v264 = vlaneseq
    %v265 = vshrl.u32 %v264, 7
    %v266 = vsub.s32 0, %v265
    %v267 = vrot.slane %v163, %v266
    %270 = vrot.lane.b32.xlu0 %v262, 32
    %v271 = vpop.permute.xlu0 %270
    %v272 = vsel %vm164, %v271, 0
    %274 = vmatprep.subr.mxu0 0.0
    %275 = vmatpush1.msra.mxu0 %v159
    %276 = vmatprep.subr.mxu0 0.0
    %277 = vmatpush1.msra.mxu0 %v160
    %278 = vmatprep.subr.mxu0 0.0
    %279 = vmatpush1.msra.mxu0 %v161
    %280 = vmatprep.subr.mxu0 0.0
    %281 = vmatpush1.msra.mxu0 %v162
    %282 = vmatprep.subr.mxu0 0.0
    %283 = vmatpush1.msra.mxu0 0.0
    %284 = vmatprep.subr.mxu0 0.0
    %285 = vmatpush1.msra.mxu0 0.0
    %286 = vmatprep.subr.mxu0 0.0
    %287 = vmatpush1.msra.mxu0 0.0
    %288 = vmatprep.subr.mxu0 0.0
    %289 = vmatpush1.msra.mxu0 0.0
    %290 = vmatprep.subr.mxu0 0.0
    %291 = vmatpush1.msra.mxu0 0.0
    %292 = vmatprep.subr.mxu0 0.0
    %293 = vmatpush1.msra.mxu0 0.0
    %294 = vmatprep.subr.mxu0 0.0
    %295 = vmatpush1.msra.mxu0 0.0
    %296 = vmatprep.subr.mxu0 0.0
    %297 = vmatpush1.msra.mxu0 0.0
    %298 = vmatprep.subr.mxu0 0.0
    %299 = vmatpush1.msra.mxu0 0.0
    %300 = vmatprep.subr.mxu0 0.0
    %301 = vmatpush1.msra.mxu0 0.0
    %302 = vmatprep.subr.mxu0 0.0
    %303 = vmatpush1.msra.mxu0 0.0
    %304 = vmatprep.subr.mxu0 0.0
    %305 = vmatpush1.msra.mxu0 0.0
    %306 = vmatprep.subr.mxu0 0.0
    %307 = vmatpush1.msra.mxu0 0.0
    %308 = vmatprep.subr.mxu0 0.0
    %309 = vmatpush1.msra.mxu0 0.0
    %310 = vmatprep.subr.mxu0 0.0
    %311 = vmatpush1.msra.mxu0 0.0
    %312 = vmatprep.subr.mxu0 0.0
    %313 = vmatpush1.msra.mxu0 0.0
    %314 = vmatprep.subr.mxu0 0.0
    %315 = vmatpush1.msra.mxu0 0.0
    %316 = vmatprep.subr.mxu0 0.0
    %317 = vmatpush1.msra.mxu0 0.0
    %318 = vmatprep.subr.mxu0 0.0
    %319 = vmatpush1.msra.mxu0 0.0
    %320 = vmatprep.subr.mxu0 0.0
    %321 = vmatpush1.msra.mxu0 0.0
    %322 = vmatprep.subr.mxu0 0.0
    %323 = vmatpush1.msra.mxu0 0.0
    %324 = vmatprep.subr.mxu0 0.0
    %325 = vmatpush1.msra.mxu0 0.0
    %326 = vmatprep.subr.mxu0 0.0
    %327 = vmatpush1.msra.mxu0 0.0
    %328 = vmatprep.subr.mxu0 0.0
    %329 = vmatpush1.msra.mxu0 0.0
    %330 = vmatprep.subr.mxu0 0.0
    %331 = vmatpush1.msra.mxu0 0.0
    %332 = vmatprep.subr.mxu0 0.0
    %333 = vmatpush1.msra.mxu0 0.0
    %334 = vmatprep.subr.mxu0 0.0
    %335 = vmatpush1.msra.mxu0 0.0
    %336 = vmatprep.subr.mxu0 0.0
    %337 = vmatpush1.msra.mxu0 0.0
    %338 = vmatprep.mubr.f32.mxu0 0.0
    %339 = vmatmul.mubr.f32.gmra.mrb[0].mxu0 %v272
    %v340 = vpop.f32.mrb[0].mxu0
    %v341 = vadd.f32 %v267, %v340
    %v342 = vpop.f32.mrb[0].mxu0
    %343 = vdwg.mxu0
    %344 = vmatprep.subr.mxu0 0.0
    %345 = vmatpush1.msra.mxu0 %v155
    %346 = vmatprep.subr.mxu0 0.0
    %347 = vmatpush1.msra.mxu0 %v156
    %348 = vmatprep.subr.mxu0 0.0
    %349 = vmatpush1.msra.mxu0 %v157
    %350 = vmatprep.subr.mxu0 0.0
    %351 = vmatpush1.msra.mxu0 %v158
    %352 = vmatprep.subr.mxu0 0.0
    %353 = vmatpush1.msra.mxu0 0.0
    %354 = vmatprep.subr.mxu0 0.0
    %355 = vmatpush1.msra.mxu0 0.0
    %356 = vmatprep.subr.mxu0 0.0
    %357 = vmatpush1.msra.mxu0 0.0
    %358 = vmatprep.subr.mxu0 0.0
    %359 = vmatpush1.msra.mxu0 0.0
    %360 = vmatprep.subr.mxu0 0.0
    %361 = vmatpush1.msra.mxu0 0.0
    %362 = vmatprep.subr.mxu0 0.0
    %363 = vmatpush1.msra.mxu0 0.0
    %364 = vmatprep.subr.mxu0 0.0
    %365 = vmatpush1.msra.mxu0 0.0
    %366 = vmatprep.subr.mxu0 0.0
    %367 = vmatpush1.msra.mxu0 0.0
    %368 = vmatprep.subr.mxu0 0.0
    %369 = vmatpush1.msra.mxu0 0.0
    %370 = vmatprep.subr.mxu0 0.0
    %371 = vmatpush1.msra.mxu0 0.0
    %372 = vmatprep.subr.mxu0 0.0
    %373 = vmatpush1.msra.mxu0 0.0
    %374 = vmatprep.subr.mxu0 0.0
    %375 = vmatpush1.msra.mxu0 0.0
    %376 = vmatprep.subr.mxu0 0.0
    %377 = vmatpush1.msra.mxu0 0.0
    %378 = vmatprep.subr.mxu0 0.0
    %379 = vmatpush1.msra.mxu0 0.0
    %380 = vmatprep.subr.mxu0 0.0
    %381 = vmatpush1.msra.mxu0 0.0
    %382 = vmatprep.subr.mxu0 0.0
    %383 = vmatpush1.msra.mxu0 0.0
    %384 = vmatprep.subr.mxu0 0.0
    %385 = vmatpush1.msra.mxu0 0.0
    %386 = vmatprep.subr.mxu0 0.0
    %387 = vmatpush1.msra.mxu0 0.0
    %388 = vmatprep.subr.mxu0 0.0
    %389 = vmatpush1.msra.mxu0 0.0
    %390 = vmatprep.subr.mxu0 0.0
    %391 = vmatpush1.msra.mxu0 0.0
    %392 = vmatprep.subr.mxu0 0.0
    %393 = vmatpush1.msra.mxu0 0.0
    %394 = vmatprep.subr.mxu0 0.0
    %395 = vmatpush1.msra.mxu0 0.0
    %396 = vmatprep.subr.mxu0 0.0
    %397 = vmatpush1.msra.mxu0 0.0
    %398 = vmatprep.subr.mxu0 0.0
    %399 = vmatpush1.msra.mxu0 0.0
    %400 = vmatprep.subr.mxu0 0.0
    %401 = vmatpush1.msra.mxu0 0.0
    %402 = vmatprep.subr.mxu0 0.0
    %403 = vmatpush1.msra.mxu0 0.0
    %404 = vmatprep.subr.mxu0 0.0
    %405 = vmatpush1.msra.mxu0 0.0
    %406 = vmatprep.subr.mxu0 0.0
    %407 = vmatpush1.msra.mxu0 0.0
    %408 = vmatprep.mubr.f32.mxu0 0.0
    %409 = vmatmul.mubr.f32.gmra.mrb[0].mxu0 %v272
    %v410 = vpop.f32.mrb[0].mxu0
    %v411 = vadd.f32 0.0, %v410
    %v412 = vpop.f32.mrb[0].mxu0
    %413 = vdwg.mxu0
    %v415 = vrot.slane %v411, 6
    %v417 = vadd.f32 %v147, %v415
    %v418 = vxor.u32 %v417, 2147483648
    %v419 = vmul.f32 %v418, 1.442695
    %v420 = vpow.pop %v419
    %v421 = vadd.f32 %v420, 1.0
    %v422 = vrcp.pop %v421
    %v423 = vmul.f32 1.0, %v422
    %v424 = vtanh.pop %v417
    %v426 = vrot.slane %v256, 6
    %v428 = vmul.f32 %v423, %v426
    %430 = vrot.lane.b32.xlu0 %v424, 64
    %v431 = vpop.permute.xlu0 %430
    %v433 = vmul.f32 %v423, %v431
    %435 = vrot.lane.b32.xlu0 %v433, 32
    %v436 = vpop.permute.xlu0 %435
    %v438 = vadd.f32 %v428, %v436
    %v439 = vtanh.pop %v438
    %441 = vrot.lane.b32.xlu0 %v439, 64
    %v442 = vpop.permute.xlu0 %441
    %v444 = vmul.f32 %v423, %v442
    %v446 = vrot.slane %v444, 2
    %447 = vrot.lane.b32.xlu0 %v446, 32
    %v448 = vpop.permute.xlu0 %447
    %v449 = vsel %vm164, %v448, 0
    %451 = vmatprep.subr.mxu0 0.0
    %452 = vmatpush1.msra.mxu0 %v159
    %453 = vmatprep.subr.mxu0 0.0
    %454 = vmatpush1.msra.mxu0 %v160
    %455 = vmatprep.subr.mxu0 0.0
    %456 = vmatpush1.msra.mxu0 %v161
    %457 = vmatprep.subr.mxu0 0.0
    %458 = vmatpush1.msra.mxu0 %v162
    %459 = vmatprep.subr.mxu0 0.0
    %460 = vmatpush1.msra.mxu0 0.0
    %461 = vmatprep.subr.mxu0 0.0
    %462 = vmatpush1.msra.mxu0 0.0
    %463 = vmatprep.subr.mxu0 0.0
    %464 = vmatpush1.msra.mxu0 0.0
    %465 = vmatprep.subr.mxu0 0.0
    %466 = vmatpush1.msra.mxu0 0.0
    %467 = vmatprep.subr.mxu0 0.0
    %468 = vmatpush1.msra.mxu0 0.0
    %469 = vmatprep.subr.mxu0 0.0
    %470 = vmatpush1.msra.mxu0 0.0
    %471 = vmatprep.subr.mxu0 0.0
    %472 = vmatpush1.msra.mxu0 0.0
    %473 = vmatprep.subr.mxu0 0.0
    %474 = vmatpush1.msra.mxu0 0.0
    %475 = vmatprep.subr.mxu0 0.0
    %476 = vmatpush1.msra.mxu0 0.0
    %477 = vmatprep.subr.mxu0 0.0
    %478 = vmatpush1.msra.mxu0 0.0
    %479 = vmatprep.subr.mxu0 0.0
    %480 = vmatpush1.msra.mxu0 0.0
    %481 = vmatprep.subr.mxu0 0.0
    %482 = vmatpush1.msra.mxu0 0.0
    %483 = vmatprep.subr.mxu0 0.0
    %484 = vmatpush1.msra.mxu0 0.0
    %485 = vmatprep.subr.mxu0 0.0
    %486 = vmatpush1.msra.mxu0 0.0
    %487 = vmatprep.subr.mxu0 0.0
    %488 = vmatpush1.msra.mxu0 0.0
    %489 = vmatprep.subr.mxu0 0.0
    %490 = vmatpush1.msra.mxu0 0.0
    %491 = vmatprep.subr.mxu0 0.0
    %492 = vmatpush1.msra.mxu0 0.0
    %493 = vmatprep.subr.mxu0 0.0
    %494 = vmatpush1.msra.mxu0 0.0
    %495 = vmatprep.subr.mxu0 0.0
    %496 = vmatpush1.msra.mxu0 0.0
    %497 = vmatprep.subr.mxu0 0.0
    %498 = vmatpush1.msra.mxu0 0.0
    %499 = vmatprep.subr.mxu0 0.0
    %500 = vmatpush1.msra.mxu0 0.0
    %501 = vmatprep.subr.mxu0 0.0
    %502 = vmatpush1.msra.mxu0 0.0
    %503 = vmatprep.subr.mxu0 0.0
    %504 = vmatpush1.msra.mxu0 0.0
    %505 = vmatprep.subr.mxu0 0.0
    %506 = vmatpush1.msra.mxu0 0.0
    %507 = vmatprep.subr.mxu0 0.0
    %508 = vmatpush1.msra.mxu0 0.0
    %509 = vmatprep.subr.mxu0 0.0
    %510 = vmatpush1.msra.mxu0 0.0
    %511 = vmatprep.subr.mxu0 0.0
    %512 = vmatpush1.msra.mxu0 0.0
    %513 = vmatprep.subr.mxu0 0.0
    %514 = vmatpush1.msra.mxu0 0.0
    %515 = vmatprep.mubr.f32.mxu0 0.0
    %516 = vmatmul.mubr.f32.gmra.mrb[0].mxu0 %v449
    %v517 = vpop.f32.mrb[0].mxu0
    %v518 = vadd.f32 %v267, %v517
    %v519 = vpop.f32.mrb[0].mxu0
    %520 = vdwg.mxu0
    %521 = vmatprep.subr.mxu0 0.0
    %522 = vmatpush1.msra.mxu0 %v155
    %523 = vmatprep.subr.mxu0 0.0
    %524 = vmatpush1.msra.mxu0 %v156
    %525 = vmatprep.subr.mxu0 0.0
    %526 = vmatpush1.msra.mxu0 %v157
    %527 = vmatprep.subr.mxu0 0.0
    %528 = vmatpush1.msra.mxu0 %v158
    %529 = vmatprep.subr.mxu0 0.0
    %530 = vmatpush1.msra.mxu0 0.0
    %531 = vmatprep.subr.mxu0 0.0
    %532 = vmatpush1.msra.mxu0 0.0
    %533 = vmatprep.subr.mxu0 0.0
    %534 = vmatpush1.msra.mxu0 0.0
    %535 = vmatprep.subr.mxu0 0.0
    %536 = vmatpush1.msra.mxu0 0.0
    %537 = vmatprep.subr.mxu0 0.0
    %538 = vmatpush1.msra.mxu0 0.0
    %539 = vmatprep.subr.mxu0 0.0
    %540 = vmatpush1.msra.mxu0 0.0
    %541 = vmatprep.subr.mxu0 0.0
    %542 = vmatpush1.msra.mxu0 0.0
    %543 = vmatprep.subr.mxu0 0.0
    %544 = vmatpush1.msra.mxu0 0.0
    %545 = vmatprep.subr.mxu0 0.0
    %546 = vmatpush1.msra.mxu0 0.0
    %547 = vmatprep.subr.mxu0 0.0
    %548 = vmatpush1.msra.mxu0 0.0
    %549 = vmatprep.subr.mxu0 0.0
    %550 = vmatpush1.msra.mxu0 0.0
    %551 = vmatprep.subr.mxu0 0.0
    %552 = vmatpush1.msra.mxu0 0.0
    %553 = vmatprep.subr.mxu0 0.0
    %554 = vmatpush1.msra.mxu0 0.0
    %555 = vmatprep.subr.mxu0 0.0
    %556 = vmatpush1.msra.mxu0 0.0
    %557 = vmatprep.subr.mxu0 0.0
    %558 = vmatpush1.msra.mxu0 0.0
    %559 = vmatprep.subr.mxu0 0.0
    %560 = vmatpush1.msra.mxu0 0.0
    %561 = vmatprep.subr.mxu0 0.0
    %562 = vmatpush1.msra.mxu0 0.0
    %563 = vmatprep.subr.mxu0 0.0
    %564 = vmatpush1.msra.mxu0 0.0
    %565 = vmatprep.subr.mxu0 0.0
    %566 = vmatpush1.msra.mxu0 0.0
    %567 = vmatprep.subr.mxu0 0.0
    %568 = vmatpush1.msra.mxu0 0.0
    %569 = vmatprep.subr.mxu0 0.0
    %570 = vmatpush1.msra.mxu0 0.0
    %571 = vmatprep.subr.mxu0 0.0
    %572 = vmatpush1.msra.mxu0 0.0
    %573 = vmatprep.subr.mxu0 0.0
    %574 = vmatpush1.msra.mxu0 0.0
    %575 = vmatprep.subr.mxu0 0.0
    %576 = vmatpush1.msra.mxu0 0.0
    %577 = vmatprep.subr.mxu0 0.0
    %578 = vmatpush1.msra.mxu0 0.0
    %579 = vmatprep.subr.mxu0 0.0
    %580 = vmatpush1.msra.mxu0 0.0
    %581 = vmatprep.subr.mxu0 0.0
    %582 = vmatpush1.msra.mxu0 0.0
    %583 = vmatprep.subr.mxu0 0.0
    %584 = vmatpush1.msra.mxu0 0.0
    %585 = vmatprep.mubr.f32.mxu0 0.0
    %586 = vmatmul.mubr.f32.gmra.mrb[0].mxu0 %v449
    %v587 = vpop.f32.mrb[0].mxu0
    %v588 = vadd.f32 0.0, %v587
    %v589 = vpop.f32.mrb[0].mxu0
    %590 = vdwg.mxu0
    %v592 = vrot.slane %v588, 4
    %v594 = vadd.f32 %v147, %v592
    %v595 = vxor.u32 %v594, 2147483648
    %v596 = vmul.f32 %v595, 1.442695
    %v597 = vpow.pop %v596
    %v598 = vadd.f32 %v597, 1.0
    %v599 = vrcp.pop %v598
    %v600 = vmul.f32 1.0, %v599
    %v601 = vtanh.pop %v594
    %v603 = vrot.slane %v438, 6
    %v605 = vmul.f32 %v600, %v603
    %607 = vrot.lane.b32.xlu0 %v601, 64
    %v608 = vpop.permute.xlu0 %607
    %v610 = vmul.f32 %v600, %v608
    %612 = vrot.lane.b32.xlu0 %v610, 32
    %v613 = vpop.permute.xlu0 %612
    %v615 = vadd.f32 %v605, %v613
    %v616 = vtanh.pop %v615
    %618 = vrot.lane.b32.xlu0 %v616, 64
    %v619 = vpop.permute.xlu0 %618
    %v621 = vmul.f32 %v600, %v619
    %v623 = vrot.slane %v621, 4
    %624 = vrot.lane.b32.xlu0 %v623, 32
    %v625 = vpop.permute.xlu0 %624
    %v626 = vsel %vm164, %v625, 0
    %628 = vmatprep.subr.mxu0 0.0
    %629 = vmatpush1.msra.mxu0 %v159
    %630 = vmatprep.subr.mxu0 0.0
    %631 = vmatpush1.msra.mxu0 %v160
    %632 = vmatprep.subr.mxu0 0.0
    %633 = vmatpush1.msra.mxu0 %v161
    %634 = vmatprep.subr.mxu0 0.0
    %635 = vmatpush1.msra.mxu0 %v162
    %636 = vmatprep.subr.mxu0 0.0
    %637 = vmatpush1.msra.mxu0 0.0
    %638 = vmatprep.subr.mxu0 0.0
    %639 = vmatpush1.msra.mxu0 0.0
    %640 = vmatprep.subr.mxu0 0.0
    %641 = vmatpush1.msra.mxu0 0.0
    %642 = vmatprep.subr.mxu0 0.0
    %643 = vmatpush1.msra.mxu0 0.0
    %644 = vmatprep.subr.mxu0 0.0
    %645 = vmatpush1.msra.mxu0 0.0
    %646 = vmatprep.subr.mxu0 0.0
    %647 = vmatpush1.msra.mxu0 0.0
    %648 = vmatprep.subr.mxu0 0.0
    %649 = vmatpush1.msra.mxu0 0.0
    %650 = vmatprep.subr.mxu0 0.0
    %651 = vmatpush1.msra.mxu0 0.0
    %652 = vmatprep.subr.mxu0 0.0
    %653 = vmatpush1.msra.mxu0 0.0
    %654 = vmatprep.subr.mxu0 0.0
    %655 = vmatpush1.msra.mxu0 0.0
    %656 = vmatprep.subr.mxu0 0.0
    %657 = vmatpush1.msra.mxu0 0.0
    %658 = vmatprep.subr.mxu0 0.0
    %659 = vmatpush1.msra.mxu0 0.0
    %660 = vmatprep.subr.mxu0 0.0
    %661 = vmatpush1.msra.mxu0 0.0
    %662 = vmatprep.subr.mxu0 0.0
    %663 = vmatpush1.msra.mxu0 0.0
    %664 = vmatprep.subr.mxu0 0.0
    %665 = vmatpush1.msra.mxu0 0.0
    %666 = vmatprep.subr.mxu0 0.0
    %667 = vmatpush1.msra.mxu0 0.0
    %668 = vmatprep.subr.mxu0 0.0
    %669 = vmatpush1.msra.mxu0 0.0
    %670 = vmatprep.subr.mxu0 0.0
    %671 = vmatpush1.msra.mxu0 0.0
    %672 = vmatprep.subr.mxu0 0.0
    %673 = vmatpush1.msra.mxu0 0.0
    %674 = vmatprep.subr.mxu0 0.0
    %675 = vmatpush1.msra.mxu0 0.0
    %676 = vmatprep.subr.mxu0 0.0
    %677 = vmatpush1.msra.mxu0 0.0
    %678 = vmatprep.subr.mxu0 0.0
    %679 = vmatpush1.msra.mxu0 0.0
    %680 = vmatprep.subr.mxu0 0.0
    %681 = vmatpush1.msra.mxu0 0.0
    %682 = vmatprep.subr.mxu0 0.0
    %683 = vmatpush1.msra.mxu0 0.0
    %684 = vmatprep.subr.mxu0 0.0
    %685 = vmatpush1.msra.mxu0 0.0
    %686 = vmatprep.subr.mxu0 0.0
    %687 = vmatpush1.msra.mxu0 0.0
    %688 = vmatprep.subr.mxu0 0.0
    %689 = vmatpush1.msra.mxu0 0.0
    %690 = vmatprep.subr.mxu0 0.0
    %691 = vmatpush1.msra.mxu0 0.0
    %692 = vmatprep.mubr.f32.mxu0 0.0
    %693 = vmatmul.mubr.f32.gmra.mrb[0].mxu0 %v626
    %v694 = vpop.f32.mrb[0].mxu0
    %v695 = vadd.f32 %v267, %v694
    %v696 = vpop.f32.mrb[0].mxu0
    %697 = vdwg.mxu0
    %698 = vmatprep.subr.mxu0 0.0
    %699 = vmatpush1.msra.mxu0 %v155
    %700 = vmatprep.subr.mxu0 0.0
    %701 = vmatpush1.msra.mxu0 %v156
    %702 = vmatprep.subr.mxu0 0.0
    %703 = vmatpush1.msra.mxu0 %v157
    %704 = vmatprep.subr.mxu0 0.0
    %705 = vmatpush1.msra.mxu0 %v158
    %706 = vmatprep.subr.mxu0 0.0
    %707 = vmatpush1.msra.mxu0 0.0
    %708 = vmatprep.subr.mxu0 0.0
    %709 = vmatpush1.msra.mxu0 0.0
    %710 = vmatprep.subr.mxu0 0.0
    %711 = vmatpush1.msra.mxu0 0.0
    %712 = vmatprep.subr.mxu0 0.0
    %713 = vmatpush1.msra.mxu0 0.0
    %714 = vmatprep.subr.mxu0 0.0
    %715 = vmatpush1.msra.mxu0 0.0
    %716 = vmatprep.subr.mxu0 0.0
    %717 = vmatpush1.msra.mxu0 0.0
    %718 = vmatprep.subr.mxu0 0.0
    %719 = vmatpush1.msra.mxu0 0.0
    %720 = vmatprep.subr.mxu0 0.0
    %721 = vmatpush1.msra.mxu0 0.0
    %722 = vmatprep.subr.mxu0 0.0
    %723 = vmatpush1.msra.mxu0 0.0
    %724 = vmatprep.subr.mxu0 0.0
    %725 = vmatpush1.msra.mxu0 0.0
    %726 = vmatprep.subr.mxu0 0.0
    %727 = vmatpush1.msra.mxu0 0.0
    %728 = vmatprep.subr.mxu0 0.0
    %729 = vmatpush1.msra.mxu0 0.0
    %730 = vmatprep.subr.mxu0 0.0
    %731 = vmatpush1.msra.mxu0 0.0
    %732 = vmatprep.subr.mxu0 0.0
    %733 = vmatpush1.msra.mxu0 0.0
    %734 = vmatprep.subr.mxu0 0.0
    %735 = vmatpush1.msra.mxu0 0.0
    %736 = vmatprep.subr.mxu0 0.0
    %737 = vmatpush1.msra.mxu0 0.0
    %738 = vmatprep.subr.mxu0 0.0
    %739 = vmatpush1.msra.mxu0 0.0
    %740 = vmatprep.subr.mxu0 0.0
    %741 = vmatpush1.msra.mxu0 0.0
    %742 = vmatprep.subr.mxu0 0.0
    %743 = vmatpush1.msra.mxu0 0.0
    %744 = vmatprep.subr.mxu0 0.0
    %745 = vmatpush1.msra.mxu0 0.0
    %746 = vmatprep.subr.mxu0 0.0
    %747 = vmatpush1.msra.mxu0 0.0
    %748 = vmatprep.subr.mxu0 0.0
    %749 = vmatpush1.msra.mxu0 0.0
    %750 = vmatprep.subr.mxu0 0.0
    %751 = vmatpush1.msra.mxu0 0.0
    %752 = vmatprep.subr.mxu0 0.0
    %753 = vmatpush1.msra.mxu0 0.0
    %754 = vmatprep.subr.mxu0 0.0
    %755 = vmatpush1.msra.mxu0 0.0
    %756 = vmatprep.subr.mxu0 0.0
    %757 = vmatpush1.msra.mxu0 0.0
    %758 = vmatprep.subr.mxu0 0.0
    %759 = vmatpush1.msra.mxu0 0.0
    %760 = vmatprep.subr.mxu0 0.0
    %761 = vmatpush1.msra.mxu0 0.0
    %762 = vmatprep.mubr.f32.mxu0 0.0
    %763 = vmatmul.mubr.f32.gmra.mrb[0].mxu0 %v626
    %v764 = vpop.f32.mrb[0].mxu0
    %v765 = vadd.f32 0.0, %v764
    %v766 = vpop.f32.mrb[0].mxu0
    %767 = vdwg.mxu0
    %v769 = vrot.slane %v765, 2
    %v771 = vadd.f32 %v147, %v769
    %v772 = vxor.u32 %v771, 2147483648
    %v773 = vmul.f32 %v772, 1.442695
    %v774 = vpow.pop %v773
    %v775 = vadd.f32 %v774, 1.0
    %v776 = vrcp.pop %v775
    %v777 = vmul.f32 1.0, %v776
    %v778 = vtanh.pop %v771
    %v780 = vrot.slane %v615, 6
    %v782 = vmul.f32 %v777, %v780
    %784 = vrot.lane.b32.xlu0 %v778, 64
    %v785 = vpop.permute.xlu0 %784
    %v787 = vmul.f32 %v777, %v785
    %789 = vrot.lane.b32.xlu0 %v787, 32
    %v790 = vpop.permute.xlu0 %789
    %v792 = vadd.f32 %v782, %v790
    %v793 = vtanh.pop %v792
    %795 = vrot.lane.b32.xlu0 %v793, 64
    %v796 = vpop.permute.xlu0 %795
    %v798 = vmul.f32 %v777, %v796
    %v800 = vrot.slane %v798, 6
    %801 = vrot.lane.b32.xlu0 %v800, 32
    %v802 = vpop.permute.xlu0 %801
    %v803 = vsel %vm164, %v802, 0
    %805 = vmatprep.subr.mxu0 0.0
    %806 = vmatpush1.msra.mxu0 %v159
    %807 = vmatprep.subr.mxu0 0.0
    %808 = vmatpush1.msra.mxu0 %v160
    %809 = vmatprep.subr.mxu0 0.0
    %810 = vmatpush1.msra.mxu0 %v161
    %811 = vmatprep.subr.mxu0 0.0
    %812 = vmatpush1.msra.mxu0 %v162
    %813 = vmatprep.subr.mxu0 0.0
    %814 = vmatpush1.msra.mxu0 0.0
    %815 = vmatprep.subr.mxu0 0.0
    %816 = vmatpush1.msra.mxu0 0.0
    %817 = vmatprep.subr.mxu0 0.0
    %818 = vmatpush1.msra.mxu0 0.0
    %819 = vmatprep.subr.mxu0 0.0
    %820 = vmatpush1.msra.mxu0 0.0
    %821 = vmatprep.subr.mxu0 0.0
    %822 = vmatpush1.msra.mxu0 0.0
    %823 = vmatprep.subr.mxu0 0.0
    %824 = vmatpush1.msra.mxu0 0.0
    %825 = vmatprep.subr.mxu0 0.0
    %826 = vmatpush1.msra.mxu0 0.0
    %827 = vmatprep.subr.mxu0 0.0
    %828 = vmatpush1.msra.mxu0 0.0
    %829 = vmatprep.subr.mxu0 0.0
    %830 = vmatpush1.msra.mxu0 0.0
    %831 = vmatprep.subr.mxu0 0.0
    %832 = vmatpush1.msra.mxu0 0.0
    %833 = vmatprep.subr.mxu0 0.0
    %834 = vmatpush1.msra.mxu0 0.0
    %835 = vmatprep.subr.mxu0 0.0
    %836 = vmatpush1.msra.mxu0 0.0
    %837 = vmatprep.subr.mxu0 0.0
    %838 = vmatpush1.msra.mxu0 0.0
    %839 = vmatprep.subr.mxu0 0.0
    %840 = vmatpush1.msra.mxu0 0.0
    %841 = vmatprep.subr.mxu0 0.0
    %842 = vmatpush1.msra.mxu0 0.0
    %843 = vmatprep.subr.mxu0 0.0
    %844 = vmatpush1.msra.mxu0 0.0
    %845 = vmatprep.subr.mxu0 0.0
    %846 = vmatpush1.msra.mxu0 0.0
    %847 = vmatprep.subr.mxu0 0.0
    %848 = vmatpush1.msra.mxu0 0.0
    %849 = vmatprep.subr.mxu0 0.0
    %850 = vmatpush1.msra.mxu0 0.0
    %851 = vmatprep.subr.mxu0 0.0
    %852 = vmatpush1.msra.mxu0 0.0
    %853 = vmatprep.subr.mxu0 0.0
    %854 = vmatpush1.msra.mxu0 0.0
    %855 = vmatprep.subr.mxu0 0.0
    %856 = vmatpush1.msra.mxu0 0.0
    %857 = vmatprep.subr.mxu0 0.0
    %858 = vmatpush1.msra.mxu0 0.0
    %859 = vmatprep.subr.mxu0 0.0
    %860 = vmatpush1.msra.mxu0 0.0
    %861 = vmatprep.subr.mxu0 0.0
    %862 = vmatpush1.msra.mxu0 0.0
    %863 = vmatprep.subr.mxu0 0.0
    %864 = vmatpush1.msra.mxu0 0.0
    %865 = vmatprep.subr.mxu0 0.0
    %866 = vmatpush1.msra.mxu0 0.0
    %867 = vmatprep.subr.mxu0 0.0
    %868 = vmatpush1.msra.mxu0 0.0
    %869 = vmatprep.mubr.f32.mxu0 0.0
    %870 = vmatmul.mubr.f32.gmra.mrb[0].mxu0 %v803
    %v871 = vpop.f32.mrb[0].mxu0
    %v872 = vadd.f32 %v267, %v871
    %v873 = vpop.f32.mrb[0].mxu0
    %874 = vdwg.mxu0
    %875 = vmatprep.subr.mxu0 0.0
    %876 = vmatpush1.msra.mxu0 %v155
    %877 = vmatprep.subr.mxu0 0.0
    %878 = vmatpush1.msra.mxu0 %v156
    %879 = vmatprep.subr.mxu0 0.0
    %880 = vmatpush1.msra.mxu0 %v157
    %881 = vmatprep.subr.mxu0 0.0
    %882 = vmatpush1.msra.mxu0 %v158
    %883 = vmatprep.subr.mxu0 0.0
    %884 = vmatpush1.msra.mxu0 0.0
    %885 = vmatprep.subr.mxu0 0.0
    %886 = vmatpush1.msra.mxu0 0.0
    %887 = vmatprep.subr.mxu0 0.0
    %888 = vmatpush1.msra.mxu0 0.0
    %889 = vmatprep.subr.mxu0 0.0
    %890 = vmatpush1.msra.mxu0 0.0
    %891 = vmatprep.subr.mxu0 0.0
    %892 = vmatpush1.msra.mxu0 0.0
    %893 = vmatprep.subr.mxu0 0.0
    %894 = vmatpush1.msra.mxu0 0.0
    %895 = vmatprep.subr.mxu0 0.0
    %896 = vmatpush1.msra.mxu0 0.0
    %897 = vmatprep.subr.mxu0 0.0
    %898 = vmatpush1.msra.mxu0 0.0
    %899 = vmatprep.subr.mxu0 0.0
    %900 = vmatpush1.msra.mxu0 0.0
    %901 = vmatprep.subr.mxu0 0.0
    %902 = vmatpush1.msra.mxu0 0.0
    %903 = vmatprep.subr.mxu0 0.0
    %904 = vmatpush1.msra.mxu0 0.0
    %905 = vmatprep.subr.mxu0 0.0
    %906 = vmatpush1.msra.mxu0 0.0
    %907 = vmatprep.subr.mxu0 0.0
    %908 = vmatpush1.msra.mxu0 0.0
    %909 = vmatprep.subr.mxu0 0.0
    %910 = vmatpush1.msra.mxu0 0.0
    %911 = vmatprep.subr.mxu0 0.0
    %912 = vmatpush1.msra.mxu0 0.0
    %913 = vmatprep.subr.mxu0 0.0
    %914 = vmatpush1.msra.mxu0 0.0
    %915 = vmatprep.subr.mxu0 0.0
    %916 = vmatpush1.msra.mxu0 0.0
    %917 = vmatprep.subr.mxu0 0.0
    %918 = vmatpush1.msra.mxu0 0.0
    %919 = vmatprep.subr.mxu0 0.0
    %920 = vmatpush1.msra.mxu0 0.0
    %921 = vmatprep.subr.mxu0 0.0
    %922 = vmatpush1.msra.mxu0 0.0
    %923 = vmatprep.subr.mxu0 0.0
    %924 = vmatpush1.msra.mxu0 0.0
    %925 = vmatprep.subr.mxu0 0.0
    %926 = vmatpush1.msra.mxu0 0.0
    %927 = vmatprep.subr.mxu0 0.0
    %928 = vmatpush1.msra.mxu0 0.0
    %929 = vmatprep.subr.mxu0 0.0
    %930 = vmatpush1.msra.mxu0 0.0
    %931 = vmatprep.subr.mxu0 0.0
    %932 = vmatpush1.msra.mxu0 0.0
    %933 = vmatprep.subr.mxu0 0.0
    %934 = vmatpush1.msra.mxu0 0.0
    %935 = vmatprep.subr.mxu0 0.0
    %936 = vmatpush1.msra.mxu0 0.0
    %937 = vmatprep.subr.mxu0 0.0
    %938 = vmatpush1.msra.mxu0 0.0
    %939 = vmatprep.mubr.f32.mxu0 0.0
    %940 = vmatmul.mubr.f32.gmra.mrb[0].mxu0 %v803
    %v941 = vpop.f32.mrb[0].mxu0
    %v942 = vadd.f32 0.0, %v941
    %v943 = vpop.f32.mrb[0].mxu0
    %944 = vdwg.mxu0
    %v945 = vadd.f32 %v152, %v942
    %v946 = vxor.u32 %v945, 2147483648
    %v947 = vmul.f32 %v946, 1.442695
    %v948 = vpow.pop %v947
    %v949 = vadd.f32 %v948, 1.0
    %v950 = vrcp.pop %v949
    %v951 = vmul.f32 1.0, %v950
    %v952 = vtanh.pop %v945
    %v954 = vrot.slane %v792, 6
    %v956 = vmul.f32 %v951, %v954
    %958 = vrot.lane.b32.xlu0 %v952, 64
    %v959 = vpop.permute.xlu0 %958
    %v961 = vmul.f32 %v951, %v959
    %963 = vrot.lane.b32.xlu0 %v961, 32
    %v964 = vpop.permute.xlu0 %963
    %v966 = vadd.f32 %v956, %v964
    %v967 = vtanh.pop %v966
    %969 = vrot.lane.b32.xlu0 %v967, 64
    %v970 = vpop.permute.xlu0 %969
    %v972 = vmul.f32 %v951, %v970
    %974 = vrot.lane.b32.xlu0 %v972, 32
    %v975 = vpop.permute.xlu0 %974
    %v976 = vsel %vm164, %v975, 0
    %978 = vmatprep.subr.mxu0 0.0
    %979 = vmatpush1.msra.mxu0 %v159
    %980 = vmatprep.subr.mxu0 0.0
    %981 = vmatpush1.msra.mxu0 %v160
    %982 = vmatprep.subr.mxu0 0.0
    %983 = vmatpush1.msra.mxu0 %v161
    %984 = vmatprep.subr.mxu0 0.0
    %985 = vmatpush1.msra.mxu0 %v162
    %986 = vmatprep.subr.mxu0 0.0
    %987 = vmatpush1.msra.mxu0 0.0
    %988 = vmatprep.subr.mxu0 0.0
    %989 = vmatpush1.msra.mxu0 0.0
    %990 = vmatprep.subr.mxu0 0.0
    %991 = vmatpush1.msra.mxu0 0.0
    %992 = vmatprep.subr.mxu0 0.0
    %993 = vmatpush1.msra.mxu0 0.0
    %994 = vmatprep.subr.mxu0 0.0
    %995 = vmatpush1.msra.mxu0 0.0
    %996 = vmatprep.subr.mxu0 0.0
    %997 = vmatpush1.msra.mxu0 0.0
    %998 = vmatprep.subr.mxu0 0.0
    %999 = vmatpush1.msra.mxu0 0.0
    %1000 = vmatprep.subr.mxu0 0.0
    %1001 = vmatpush1.msra.mxu0 0.0
    %1002 = vmatprep.subr.mxu0 0.0
    %1003 = vmatpush1.msra.mxu0 0.0
    %1004 = vmatprep.subr.mxu0 0.0
    %1005 = vmatpush1.msra.mxu0 0.0
    %1006 = vmatprep.subr.mxu0 0.0
    %1007 = vmatpush1.msra.mxu0 0.0
    %1008 = vmatprep.subr.mxu0 0.0
    %1009 = vmatpush1.msra.mxu0 0.0
    %1010 = vmatprep.subr.mxu0 0.0
    %1011 = vmatpush1.msra.mxu0 0.0
    %1012 = vmatprep.subr.mxu0 0.0
    %1013 = vmatpush1.msra.mxu0 0.0
    %1014 = vmatprep.subr.mxu0 0.0
    %1015 = vmatpush1.msra.mxu0 0.0
    %1016 = vmatprep.subr.mxu0 0.0
    %1017 = vmatpush1.msra.mxu0 0.0
    %1018 = vmatprep.subr.mxu0 0.0
    %1019 = vmatpush1.msra.mxu0 0.0
    %1020 = vmatprep.subr.mxu0 0.0
    %1021 = vmatpush1.msra.mxu0 0.0
    %1022 = vmatprep.subr.mxu0 0.0
    %1023 = vmatpush1.msra.mxu0 0.0
    %1024 = vmatprep.subr.mxu0 0.0
    %1025 = vmatpush1.msra.mxu0 0.0
    %1026 = vmatprep.subr.mxu0 0.0
    %1027 = vmatpush1.msra.mxu0 0.0
    %1028 = vmatprep.subr.mxu0 0.0
    %1029 = vmatpush1.msra.mxu0 0.0
    %1030 = vmatprep.subr.mxu0 0.0
    %1031 = vmatpush1.msra.mxu0 0.0
    %1032 = vmatprep.subr.mxu0 0.0
    %1033 = vmatpush1.msra.mxu0 0.0
    %1034 = vmatprep.subr.mxu0 0.0
    %1035 = vmatpush1.msra.mxu0 0.0
    %1036 = vmatprep.subr.mxu0 0.0
    %1037 = vmatpush1.msra.mxu0 0.0
    %1038 = vmatprep.subr.mxu0 0.0
    %1039 = vmatpush1.msra.mxu0 0.0
    %1040 = vmatprep.subr.mxu0 0.0
    %1041 = vmatpush1.msra.mxu0 0.0
    %1042 = vmatprep.mubr.f32.mxu0 0.0
    %1043 = vmatmul.mubr.f32.gmra.mrb[0].mxu0 %v976
    %v1044 = vpop.f32.mrb[0].mxu0
    %v1045 = vadd.f32 %v267, %v1044
    %v1046 = vpop.f32.mrb[0].mxu0
    %1047 = vdwg.mxu0
    %1048 = vmatprep.subr.mxu0 0.0
    %1049 = vmatpush1.msra.mxu0 %v155
    %1050 = vmatprep.subr.mxu0 0.0
    %1051 = vmatpush1.msra.mxu0 %v156
    %1052 = vmatprep.subr.mxu0 0.0
    %1053 = vmatpush1.msra.mxu0 %v157
    %1054 = vmatprep.subr.mxu0 0.0
    %1055 = vmatpush1.msra.mxu0 %v158
    %1056 = vmatprep.subr.mxu0 0.0
    %1057 = vmatpush1.msra.mxu0 0.0
    %1058 = vmatprep.subr.mxu0 0.0
    %1059 = vmatpush1.msra.mxu0 0.0
    %1060 = vmatprep.subr.mxu0 0.0
    %1061 = vmatpush1.msra.mxu0 0.0
    %1062 = vmatprep.subr.mxu0 0.0
    %1063 = vmatpush1.msra.mxu0 0.0
    %1064 = vmatprep.subr.mxu0 0.0
    %1065 = vmatpush1.msra.mxu0 0.0
    %1066 = vmatprep.subr.mxu0 0.0
    %1067 = vmatpush1.msra.mxu0 0.0
    %1068 = vmatprep.subr.mxu0 0.0
    %1069 = vmatpush1.msra.mxu0 0.0
    %1070 = vmatprep.subr.mxu0 0.0
    %1071 = vmatpush1.msra.mxu0 0.0
    %1072 = vmatprep.subr.mxu0 0.0
    %1073 = vmatpush1.msra.mxu0 0.0
    %1074 = vmatprep.subr.mxu0 0.0
    %1075 = vmatpush1.msra.mxu0 0.0
    %1076 = vmatprep.subr.mxu0 0.0
    %1077 = vmatpush1.msra.mxu0 0.0
    %1078 = vmatprep.subr.mxu0 0.0
    %1079 = vmatpush1.msra.mxu0 0.0
    %1080 = vmatprep.subr.mxu0 0.0
    %1081 = vmatpush1.msra.mxu0 0.0
    %1082 = vmatprep.subr.mxu0 0.0
    %1083 = vmatpush1.msra.mxu0 0.0
    %1084 = vmatprep.subr.mxu0 0.0
    %1085 = vmatpush1.msra.mxu0 0.0
    %1086 = vmatprep.subr.mxu0 0.0
    %1087 = vmatpush1.msra.mxu0 0.0
    %1088 = vmatprep.subr.mxu0 0.0
    %1089 = vmatpush1.msra.mxu0 0.0
    %1090 = vmatprep.subr.mxu0 0.0
    %1091 = vmatpush1.msra.mxu0 0.0
    %1092 = vmatprep.subr.mxu0 0.0
    %1093 = vmatpush1.msra.mxu0 0.0
    %1094 = vmatprep.subr.mxu0 0.0
    %1095 = vmatpush1.msra.mxu0 0.0
    %1096 = vmatprep.subr.mxu0 0.0
    %1097 = vmatpush1.msra.mxu0 0.0
    %1098 = vmatprep.subr.mxu0 0.0
    %1099 = vmatpush1.msra.mxu0 0.0
    %1100 = vmatprep.subr.mxu0 0.0
    %1101 = vmatpush1.msra.mxu0 0.0
    %1102 = vmatprep.subr.mxu0 0.0
    %1103 = vmatpush1.msra.mxu0 0.0
    %1104 = vmatprep.subr.mxu0 0.0
    %1105 = vmatpush1.msra.mxu0 0.0
    %1106 = vmatprep.subr.mxu0 0.0
    %1107 = vmatpush1.msra.mxu0 0.0
    %1108 = vmatprep.subr.mxu0 0.0
    %1109 = vmatpush1.msra.mxu0 0.0
    %1110 = vmatprep.subr.mxu0 0.0
    %1111 = vmatpush1.msra.mxu0 0.0
    %1112 = vmatprep.mubr.f32.mxu0 0.0
    %1113 = vmatmul.mubr.f32.gmra.mrb[0].mxu0 %v976
    %v1114 = vpop.f32.mrb[0].mxu0
    %v1115 = vadd.f32 0.0, %v1114
    %v1116 = vpop.f32.mrb[0].mxu0
    %1117 = vdwg.mxu0
    %v1119 = vrot.slane %v1115, 6
    %v1121 = vadd.f32 %v152, %v1119
    %v1122 = vxor.u32 %v1121, 2147483648
    %v1123 = vmul.f32 %v1122, 1.442695
    %v1124 = vpow.pop %v1123
    %v1125 = vadd.f32 %v1124, 1.0
    %v1126 = vrcp.pop %v1125
    %v1127 = vmul.f32 1.0, %v1126
    %v1128 = vtanh.pop %v1121
    %v1130 = vrot.slane %v966, 6
    %v1132 = vmul.f32 %v1127, %v1130
    %1134 = vrot.lane.b32.xlu0 %v1128, 64
    %v1135 = vpop.permute.xlu0 %1134
    %v1137 = vmul.f32 %v1127, %v1135
    %1139 = vrot.lane.b32.xlu0 %v1137, 32
    %v1140 = vpop.permute.xlu0 %1139
    %v1142 = vadd.f32 %v1132, %v1140
    %v1143 = vtanh.pop %v1142
    %1145 = vrot.lane.b32.xlu0 %v1143, 64
    %v1146 = vpop.permute.xlu0 %1145
    %v1148 = vmul.f32 %v1127, %v1146
    %v1150 = vrot.slane %v1148, 2
    %1151 = vrot.lane.b32.xlu0 %v1150, 32
    %v1152 = vpop.permute.xlu0 %1151
    %v1153 = vsel %vm164, %v1152, 0
    %1155 = vmatprep.subr.mxu0 0.0
    %1156 = vmatpush1.msra.mxu0 %v159
    %1157 = vmatprep.subr.mxu0 0.0
    %1158 = vmatpush1.msra.mxu0 %v160
    %1159 = vmatprep.subr.mxu0 0.0
    %1160 = vmatpush1.msra.mxu0 %v161
    %1161 = vmatprep.subr.mxu0 0.0
    %1162 = vmatpush1.msra.mxu0 %v162
    %1163 = vmatprep.subr.mxu0 0.0
    %1164 = vmatpush1.msra.mxu0 0.0
    %1165 = vmatprep.subr.mxu0 0.0
    %1166 = vmatpush1.msra.mxu0 0.0
    %1167 = vmatprep.subr.mxu0 0.0
    %1168 = vmatpush1.msra.mxu0 0.0
    %1169 = vmatprep.subr.mxu0 0.0
    %1170 = vmatpush1.msra.mxu0 0.0
    %1171 = vmatprep.subr.mxu0 0.0
    %1172 = vmatpush1.msra.mxu0 0.0
    %1173 = vmatprep.subr.mxu0 0.0
    %1174 = vmatpush1.msra.mxu0 0.0
    %1175 = vmatprep.subr.mxu0 0.0
    %1176 = vmatpush1.msra.mxu0 0.0
    %1177 = vmatprep.subr.mxu0 0.0
    %1178 = vmatpush1.msra.mxu0 0.0
    %1179 = vmatprep.subr.mxu0 0.0
    %1180 = vmatpush1.msra.mxu0 0.0
    %1181 = vmatprep.subr.mxu0 0.0
    %1182 = vmatpush1.msra.mxu0 0.0
    %1183 = vmatprep.subr.mxu0 0.0
    %1184 = vmatpush1.msra.mxu0 0.0
    %1185 = vmatprep.subr.mxu0 0.0
    %1186 = vmatpush1.msra.mxu0 0.0
    %1187 = vmatprep.subr.mxu0 0.0
    %1188 = vmatpush1.msra.mxu0 0.0
    %1189 = vmatprep.subr.mxu0 0.0
    %1190 = vmatpush1.msra.mxu0 0.0
    %1191 = vmatprep.subr.mxu0 0.0
    %1192 = vmatpush1.msra.mxu0 0.0
    %1193 = vmatprep.subr.mxu0 0.0
    %1194 = vmatpush1.msra.mxu0 0.0
    %1195 = vmatprep.subr.mxu0 0.0
    %1196 = vmatpush1.msra.mxu0 0.0
    %1197 = vmatprep.subr.mxu0 0.0
    %1198 = vmatpush1.msra.mxu0 0.0
    %1199 = vmatprep.subr.mxu0 0.0
    %1200 = vmatpush1.msra.mxu0 0.0
    %1201 = vmatprep.subr.mxu0 0.0
    %1202 = vmatpush1.msra.mxu0 0.0
    %1203 = vmatprep.subr.mxu0 0.0
    %1204 = vmatpush1.msra.mxu0 0.0
    %1205 = vmatprep.subr.mxu0 0.0
    %1206 = vmatpush1.msra.mxu0 0.0
    %1207 = vmatprep.subr.mxu0 0.0
    %1208 = vmatpush1.msra.mxu0 0.0
    %1209 = vmatprep.subr.mxu0 0.0
    %1210 = vmatpush1.msra.mxu0 0.0
    %1211 = vmatprep.subr.mxu0 0.0
    %1212 = vmatpush1.msra.mxu0 0.0
    %1213 = vmatprep.subr.mxu0 0.0
    %1214 = vmatpush1.msra.mxu0 0.0
    %1215 = vmatprep.subr.mxu0 0.0
    %1216 = vmatpush1.msra.mxu0 0.0
    %1217 = vmatprep.subr.mxu0 0.0
    %1218 = vmatpush1.msra.mxu0 0.0
    %1219 = vmatprep.mubr.f32.mxu0 0.0
    %1220 = vmatmul.mubr.f32.gmra.mrb[0].mxu0 %v1153
    %v1221 = vpop.f32.mrb[0].mxu0
    %v1222 = vadd.f32 %v267, %v1221
    %v1223 = vpop.f32.mrb[0].mxu0
    %1224 = vdwg.mxu0
    %1225 = vmatprep.subr.mxu0 0.0
    %1226 = vmatpush1.msra.mxu0 %v155
    %1227 = vmatprep.subr.mxu0 0.0
    %1228 = vmatpush1.msra.mxu0 %v156
    %1229 = vmatprep.subr.mxu0 0.0
    %1230 = vmatpush1.msra.mxu0 %v157
    %1231 = vmatprep.subr.mxu0 0.0
    %1232 = vmatpush1.msra.mxu0 %v158
    %1233 = vmatprep.subr.mxu0 0.0
    %1234 = vmatpush1.msra.mxu0 0.0
    %1235 = vmatprep.subr.mxu0 0.0
    %1236 = vmatpush1.msra.mxu0 0.0
    %1237 = vmatprep.subr.mxu0 0.0
    %1238 = vmatpush1.msra.mxu0 0.0
    %1239 = vmatprep.subr.mxu0 0.0
    %1240 = vmatpush1.msra.mxu0 0.0
    %1241 = vmatprep.subr.mxu0 0.0
    %1242 = vmatpush1.msra.mxu0 0.0
    %1243 = vmatprep.subr.mxu0 0.0
    %1244 = vmatpush1.msra.mxu0 0.0
    %1245 = vmatprep.subr.mxu0 0.0
    %1246 = vmatpush1.msra.mxu0 0.0
    %1247 = vmatprep.subr.mxu0 0.0
    %1248 = vmatpush1.msra.mxu0 0.0
    %1249 = vmatprep.subr.mxu0 0.0
    %1250 = vmatpush1.msra.mxu0 0.0
    %1251 = vmatprep.subr.mxu0 0.0
    %1252 = vmatpush1.msra.mxu0 0.0
    %1253 = vmatprep.subr.mxu0 0.0
    %1254 = vmatpush1.msra.mxu0 0.0
    %1255 = vmatprep.subr.mxu0 0.0
    %1256 = vmatpush1.msra.mxu0 0.0
    %1257 = vmatprep.subr.mxu0 0.0
    %1258 = vmatpush1.msra.mxu0 0.0
    %1259 = vmatprep.subr.mxu0 0.0
    %1260 = vmatpush1.msra.mxu0 0.0
    %1261 = vmatprep.subr.mxu0 0.0
    %1262 = vmatpush1.msra.mxu0 0.0
    %1263 = vmatprep.subr.mxu0 0.0
    %1264 = vmatpush1.msra.mxu0 0.0
    %1265 = vmatprep.subr.mxu0 0.0
    %1266 = vmatpush1.msra.mxu0 0.0
    %1267 = vmatprep.subr.mxu0 0.0
    %1268 = vmatpush1.msra.mxu0 0.0
    %1269 = vmatprep.subr.mxu0 0.0
    %1270 = vmatpush1.msra.mxu0 0.0
    %1271 = vmatprep.subr.mxu0 0.0
    %1272 = vmatpush1.msra.mxu0 0.0
    %1273 = vmatprep.subr.mxu0 0.0
    %1274 = vmatpush1.msra.mxu0 0.0
    %1275 = vmatprep.subr.mxu0 0.0
    %1276 = vmatpush1.msra.mxu0 0.0
    %1277 = vmatprep.subr.mxu0 0.0
    %1278 = vmatpush1.msra.mxu0 0.0
    %1279 = vmatprep.subr.mxu0 0.0
    %1280 = vmatpush1.msra.mxu0 0.0
    %1281 = vmatprep.subr.mxu0 0.0
    %1282 = vmatpush1.msra.mxu0 0.0
    %1283 = vmatprep.subr.mxu0 0.0
    %1284 = vmatpush1.msra.mxu0 0.0
    %1285 = vmatprep.subr.mxu0 0.0
    %1286 = vmatpush1.msra.mxu0 0.0
    %1287 = vmatprep.subr.mxu0 0.0
    %1288 = vmatpush1.msra.mxu0 0.0
    %1289 = vmatprep.mubr.f32.mxu0 0.0
    %1290 = vmatmul.mubr.f32.gmra.mrb[0].mxu0 %v1153
    %v1291 = vpop.f32.mrb[0].mxu0
    %v1292 = vadd.f32 0.0, %v1291
    %v1293 = vpop.f32.mrb[0].mxu0
    %1294 = vdwg.mxu0
    %v1296 = vrot.slane %v1292, 4
    %v1298 = vadd.f32 %v152, %v1296
    %v1299 = vxor.u32 %v1298, 2147483648
    %v1300 = vmul.f32 %v1299, 1.442695
    %v1301 = vpow.pop %v1300
    %v1302 = vadd.f32 %v1301, 1.0
    %v1303 = vrcp.pop %v1302
    %v1304 = vmul.f32 1.0, %v1303
    %v1305 = vtanh.pop %v1298
    %v1307 = vrot.slane %v1142, 6
    %v1309 = vmul.f32 %v1304, %v1307
    %1311 = vrot.lane.b32.xlu0 %v1305, 64
    %v1312 = vpop.permute.xlu0 %1311
    %v1314 = vmul.f32 %v1304, %v1312
    %1316 = vrot.lane.b32.xlu0 %v1314, 32
    %v1317 = vpop.permute.xlu0 %1316
    %v1319 = vadd.f32 %v1309, %v1317
    %v1320 = vtanh.pop %v1319
    %1322 = vrot.lane.b32.xlu0 %v1320, 64
    %v1323 = vpop.permute.xlu0 %1322
    %v1325 = vmul.f32 %v1304, %v1323
    %v1327 = vrot.slane %v1325, 4
    %1328 = vrot.lane.b32.xlu0 %v1327, 32
    %v1329 = vpop.permute.xlu0 %1328
    %v1330 = vsel %vm164, %v1329, 0
    %1332 = vmatprep.subr.mxu0 0.0
    %1333 = vmatpush1.msra.mxu0 %v159
    %1334 = vmatprep.subr.mxu0 0.0
    %1335 = vmatpush1.msra.mxu0 %v160
    %1336 = vmatprep.subr.mxu0 0.0
    %1337 = vmatpush1.msra.mxu0 %v161
    %1338 = vmatprep.subr.mxu0 0.0
    %1339 = vmatpush1.msra.mxu0 %v162
    %1340 = vmatprep.subr.mxu0 0.0
    %1341 = vmatpush1.msra.mxu0 0.0
    %1342 = vmatprep.subr.mxu0 0.0
    %1343 = vmatpush1.msra.mxu0 0.0
    %1344 = vmatprep.subr.mxu0 0.0
    %1345 = vmatpush1.msra.mxu0 0.0
    %1346 = vmatprep.subr.mxu0 0.0
    %1347 = vmatpush1.msra.mxu0 0.0
    %1348 = vmatprep.subr.mxu0 0.0
    %1349 = vmatpush1.msra.mxu0 0.0
    %1350 = vmatprep.subr.mxu0 0.0
    %1351 = vmatpush1.msra.mxu0 0.0
    %1352 = vmatprep.subr.mxu0 0.0
    %1353 = vmatpush1.msra.mxu0 0.0
    %1354 = vmatprep.subr.mxu0 0.0
    %1355 = vmatpush1.msra.mxu0 0.0
    %1356 = vmatprep.subr.mxu0 0.0
    %1357 = vmatpush1.msra.mxu0 0.0
    %1358 = vmatprep.subr.mxu0 0.0
    %1359 = vmatpush1.msra.mxu0 0.0
    %1360 = vmatprep.subr.mxu0 0.0
    %1361 = vmatpush1.msra.mxu0 0.0
    %1362 = vmatprep.subr.mxu0 0.0
    %1363 = vmatpush1.msra.mxu0 0.0
    %1364 = vmatprep.subr.mxu0 0.0
    %1365 = vmatpush1.msra.mxu0 0.0
    %1366 = vmatprep.subr.mxu0 0.0
    %1367 = vmatpush1.msra.mxu0 0.0
    %1368 = vmatprep.subr.mxu0 0.0
    %1369 = vmatpush1.msra.mxu0 0.0
    %1370 = vmatprep.subr.mxu0 0.0
    %1371 = vmatpush1.msra.mxu0 0.0
    %1372 = vmatprep.subr.mxu0 0.0
    %1373 = vmatpush1.msra.mxu0 0.0
    %1374 = vmatprep.subr.mxu0 0.0
    %1375 = vmatpush1.msra.mxu0 0.0
    %1376 = vmatprep.subr.mxu0 0.0
    %1377 = vmatpush1.msra.mxu0 0.0
    %1378 = vmatprep.subr.mxu0 0.0
    %1379 = vmatpush1.msra.mxu0 0.0
    %1380 = vmatprep.subr.mxu0 0.0
    %1381 = vmatpush1.msra.mxu0 0.0
    %1382 = vmatprep.subr.mxu0 0.0
    %1383 = vmatpush1.msra.mxu0 0.0
    %1384 = vmatprep.subr.mxu0 0.0
    %1385 = vmatpush1.msra.mxu0 0.0
    %1386 = vmatprep.subr.mxu0 0.0
    %1387 = vmatpush1.msra.mxu0 0.0
    %1388 = vmatprep.subr.mxu0 0.0
    %1389 = vmatpush1.msra.mxu0 0.0
    %1390 = vmatprep.subr.mxu0 0.0
    %1391 = vmatpush1.msra.mxu0 0.0
    %1392 = vmatprep.subr.mxu0 0.0
    %1393 = vmatpush1.msra.mxu0 0.0
    %1394 = vmatprep.subr.mxu0 0.0
    %1395 = vmatpush1.msra.mxu0 0.0
    %1396 = vmatprep.mubr.f32.mxu0 0.0
    %1397 = vmatmul.mubr.f32.gmra.mrb[0].mxu0 %v1330
    %v1398 = vpop.f32.mrb[0].mxu0
    %v1399 = vadd.f32 %v267, %v1398
    %v1400 = vpop.f32.mrb[0].mxu0
    %1401 = vdwg.mxu0
    %1402 = vmatprep.subr.mxu0 0.0
    %1403 = vmatpush1.msra.mxu0 %v155
    %1404 = vmatprep.subr.mxu0 0.0
    %1405 = vmatpush1.msra.mxu0 %v156
    %1406 = vmatprep.subr.mxu0 0.0
    %1407 = vmatpush1.msra.mxu0 %v157
    %1408 = vmatprep.subr.mxu0 0.0
    %1409 = vmatpush1.msra.mxu0 %v158
    %1410 = vmatprep.subr.mxu0 0.0
    %1411 = vmatpush1.msra.mxu0 0.0
    %1412 = vmatprep.subr.mxu0 0.0
    %1413 = vmatpush1.msra.mxu0 0.0
    %1414 = vmatprep.subr.mxu0 0.0
    %1415 = vmatpush1.msra.mxu0 0.0
    %1416 = vmatprep.subr.mxu0 0.0
    %1417 = vmatpush1.msra.mxu0 0.0
    %1418 = vmatprep.subr.mxu0 0.0
    %1419 = vmatpush1.msra.mxu0 0.0
    %1420 = vmatprep.subr.mxu0 0.0
    %1421 = vmatpush1.msra.mxu0 0.0
    %1422 = vmatprep.subr.mxu0 0.0
    %1423 = vmatpush1.msra.mxu0 0.0
    %1424 = vmatprep.subr.mxu0 0.0
    %1425 = vmatpush1.msra.mxu0 0.0
    %1426 = vmatprep.subr.mxu0 0.0
    %1427 = vmatpush1.msra.mxu0 0.0
    %1428 = vmatprep.subr.mxu0 0.0
    %1429 = vmatpush1.msra.mxu0 0.0
    %1430 = vmatprep.subr.mxu0 0.0
    %1431 = vmatpush1.msra.mxu0 0.0
    %1432 = vmatprep.subr.mxu0 0.0
    %1433 = vmatpush1.msra.mxu0 0.0
    %1434 = vmatprep.subr.mxu0 0.0
    %1435 = vmatpush1.msra.mxu0 0.0
    %1436 = vmatprep.subr.mxu0 0.0
    %1437 = vmatpush1.msra.mxu0 0.0
    %1438 = vmatprep.subr.mxu0 0.0
    %1439 = vmatpush1.msra.mxu0 0.0
    %1440 = vmatprep.subr.mxu0 0.0
    %1441 = vmatpush1.msra.mxu0 0.0
    %1442 = vmatprep.subr.mxu0 0.0
    %1443 = vmatpush1.msra.mxu0 0.0
    %1444 = vmatprep.subr.mxu0 0.0
    %1445 = vmatpush1.msra.mxu0 0.0
    %1446 = vmatprep.subr.mxu0 0.0
    %1447 = vmatpush1.msra.mxu0 0.0
    %1448 = vmatprep.subr.mxu0 0.0
    %1449 = vmatpush1.msra.mxu0 0.0
    %1450 = vmatprep.subr.mxu0 0.0
    %1451 = vmatpush1.msra.mxu0 0.0
    %1452 = vmatprep.subr.mxu0 0.0
    %1453 = vmatpush1.msra.mxu0 0.0
    %1454 = vmatprep.subr.mxu0 0.0
    %1455 = vmatpush1.msra.mxu0 0.0
    %1456 = vmatprep.subr.mxu0 0.0
    %1457 = vmatpush1.msra.mxu0 0.0
    %1458 = vmatprep.subr.mxu0 0.0
    %1459 = vmatpush1.msra.mxu0 0.0
    %1460 = vmatprep.subr.mxu0 0.0
    %1461 = vmatpush1.msra.mxu0 0.0
    %1462 = vmatprep.subr.mxu0 0.0
    %1463 = vmatpush1.msra.mxu0 0.0
    %1464 = vmatprep.subr.mxu0 0.0
    %1465 = vmatpush1.msra.mxu0 0.0
    %1466 = vmatprep.mubr.f32.mxu0 0.0
    %1467 = vmatmul.mubr.f32.gmra.mrb[0].mxu0 %v1330
    %v1468 = vpop.f32.mrb[0].mxu0
    %v1469 = vadd.f32 0.0, %v1468
    %v1470 = vpop.f32.mrb[0].mxu0
    %1471 = vdwg.mxu0
    %v1473 = vrot.slane %v1469, 2
    %v1475 = vadd.f32 %v152, %v1473
    %v1476 = vxor.u32 %v1475, 2147483648
    %v1477 = vmul.f32 %v1476, 1.442695
    %v1478 = vpow.pop %v1477
    %v1479 = vadd.f32 %v1478, 1.0
    %v1480 = vrcp.pop %v1479
    %v1481 = vmul.f32 1.0, %v1480
    %v1482 = vtanh.pop %v1475
    %v1484 = vrot.slane %v1319, 6
    %v1486 = vmul.f32 %v1481, %v1484
    %1488 = vrot.lane.b32.xlu0 %v1482, 64
    %v1489 = vpop.permute.xlu0 %1488
    %v1491 = vmul.f32 %v1481, %v1489
    %1493 = vrot.lane.b32.xlu0 %v1491, 32
    %v1494 = vpop.permute.xlu0 %1493
    %v1496 = vadd.f32 %v1486, %v1494
    %v1497 = vtanh.pop %v1496
    %1499 = vrot.lane.b32.xlu0 %v1497, 64
    %v1500 = vpop.permute.xlu0 %1499
    %v1502 = vmul.f32 %v1481, %v1500
    %v1504 = vrot.slane %v1502, 6
    %1505 = vrot.lane.b32.xlu0 %v1504, 32
    %v1506 = vpop.permute.xlu0 %1505
    %v1507 = vsel %vm164, %v1506, 0
    %1509 = vmatprep.subr.mxu0 0.0
    %1510 = vmatpush1.msra.mxu0 %v159
    %1511 = vmatprep.subr.mxu0 0.0
    %1512 = vmatpush1.msra.mxu0 %v160
    %1513 = vmatprep.subr.mxu0 0.0
    %1514 = vmatpush1.msra.mxu0 %v161
    %1515 = vmatprep.subr.mxu0 0.0
    %1516 = vmatpush1.msra.mxu0 %v162
    %1517 = vmatprep.subr.mxu0 0.0
    %1518 = vmatpush1.msra.mxu0 0.0
    %1519 = vmatprep.subr.mxu0 0.0
    %1520 = vmatpush1.msra.mxu0 0.0
    %1521 = vmatprep.subr.mxu0 0.0
    %1522 = vmatpush1.msra.mxu0 0.0
    %1523 = vmatprep.subr.mxu0 0.0
    %1524 = vmatpush1.msra.mxu0 0.0
    %1525 = vmatprep.subr.mxu0 0.0
    %1526 = vmatpush1.msra.mxu0 0.0
    %1527 = vmatprep.subr.mxu0 0.0
    %1528 = vmatpush1.msra.mxu0 0.0
    %1529 = vmatprep.subr.mxu0 0.0
    %1530 = vmatpush1.msra.mxu0 0.0
    %1531 = vmatprep.subr.mxu0 0.0
    %1532 = vmatpush1.msra.mxu0 0.0
    %1533 = vmatprep.subr.mxu0 0.0
    %1534 = vmatpush1.msra.mxu0 0.0
    %1535 = vmatprep.subr.mxu0 0.0
    %1536 = vmatpush1.msra.mxu0 0.0
    %1537 = vmatprep.subr.mxu0 0.0
    %1538 = vmatpush1.msra.mxu0 0.0
    %1539 = vmatprep.subr.mxu0 0.0
    %1540 = vmatpush1.msra.mxu0 0.0
    %1541 = vmatprep.subr.mxu0 0.0
    %1542 = vmatpush1.msra.mxu0 0.0
    %1543 = vmatprep.subr.mxu0 0.0
    %1544 = vmatpush1.msra.mxu0 0.0
    %1545 = vmatprep.subr.mxu0 0.0
    %1546 = vmatpush1.msra.mxu0 0.0
    %1547 = vmatprep.subr.mxu0 0.0
    %1548 = vmatpush1.msra.mxu0 0.0
    %1549 = vmatprep.subr.mxu0 0.0
    %1550 = vmatpush1.msra.mxu0 0.0
    %1551 = vmatprep.subr.mxu0 0.0
    %1552 = vmatpush1.msra.mxu0 0.0
    %1553 = vmatprep.subr.mxu0 0.0
    %1554 = vmatpush1.msra.mxu0 0.0
    %1555 = vmatprep.subr.mxu0 0.0
    %1556 = vmatpush1.msra.mxu0 0.0
    %1557 = vmatprep.subr.mxu0 0.0
    %1558 = vmatpush1.msra.mxu0 0.0
    %1559 = vmatprep.subr.mxu0 0.0
    %1560 = vmatpush1.msra.mxu0 0.0
    %1561 = vmatprep.subr.mxu0 0.0
    %1562 = vmatpush1.msra.mxu0 0.0
    %1563 = vmatprep.subr.mxu0 0.0
    %1564 = vmatpush1.msra.mxu0 0.0
    %1565 = vmatprep.subr.mxu0 0.0
    %1566 = vmatpush1.msra.mxu0 0.0
    %1567 = vmatprep.subr.mxu0 0.0
    %1568 = vmatpush1.msra.mxu0 0.0
    %1569 = vmatprep.subr.mxu0 0.0
    %1570 = vmatpush1.msra.mxu0 0.0
    %1571 = vmatprep.subr.mxu0 0.0
    %1572 = vmatpush1.msra.mxu0 0.0
    %1573 = vmatprep.mubr.f32.mxu0 0.0
    %1574 = vmatmul.mubr.f32.gmra.mrb[0].mxu0 %v1507
    %v1575 = vpop.f32.mrb[0].mxu0
    %v1576 = vadd.f32 %v267, %v1575
    %v1577 = vpop.f32.mrb[0].mxu0
    %1578 = vdwg.mxu0
    %v1579 = vld [vmem:[#allocation5] sm:$0xff]
    %v1580 = vld [vmem:[#allocation5 + $0x8] sm:$0xff]
    %v1581 = vld [vmem:[#allocation5 + $0x10] sm:$0xff]
    %v1582 = vld [vmem:[#allocation5 + $0x18] sm:$0xff]
    %1583 = vmatprep.subr.mxu0 0.0
    %1584 = vmatpush1.msra.mxu0 %v1579
    %1585 = vmatprep.subr.mxu0 0.0
    %1586 = vmatpush1.msra.mxu0 %v1580
    %1587 = vmatprep.subr.mxu0 0.0
    %1588 = vmatpush1.msra.mxu0 %v1581
    %1589 = vmatprep.subr.mxu0 0.0
    %1590 = vmatpush1.msra.mxu0 %v1582
    %1591 = vmatprep.subr.mxu0 0.0
    %1592 = vmatpush1.msra.mxu0 0.0
    %1593 = vmatprep.subr.mxu0 0.0
    %1594 = vmatpush1.msra.mxu0 0.0
    %1595 = vmatprep.subr.mxu0 0.0
    %1596 = vmatpush1.msra.mxu0 0.0
    %1597 = vmatprep.subr.mxu0 0.0
    %1598 = vmatpush1.msra.mxu0 0.0
    %1599 = vmatprep.subr.mxu0 0.0
    %1600 = vmatpush1.msra.mxu0 0.0
    %1601 = vmatprep.subr.mxu0 0.0
    %1602 = vmatpush1.msra.mxu0 0.0
    %1603 = vmatprep.subr.mxu0 0.0
    %1604 = vmatpush1.msra.mxu0 0.0
    %1605 = vmatprep.subr.mxu0 0.0
    %1606 = vmatpush1.msra.mxu0 0.0
    %1607 = vmatprep.subr.mxu0 0.0
    %1608 = vmatpush1.msra.mxu0 0.0
    %1609 = vmatprep.subr.mxu0 0.0
    %1610 = vmatpush1.msra.mxu0 0.0
    %1611 = vmatprep.subr.mxu0 0.0
    %1612 = vmatpush1.msra.mxu0 0.0
    %1613 = vmatprep.subr.mxu0 0.0
    %1614 = vmatpush1.msra.mxu0 0.0
    %1615 = vmatprep.subr.mxu0 0.0
    %1616 = vmatpush1.msra.mxu0 0.0
    %1617 = vmatprep.subr.mxu0 0.0
    %1618 = vmatpush1.msra.mxu0 0.0
    %1619 = vmatprep.subr.mxu0 0.0
    %1620 = vmatpush1.msra.mxu0 0.0
    %1621 = vmatprep.subr.mxu0 0.0
    %1622 = vmatpush1.msra.mxu0 0.0
    %1623 = vmatprep.subr.mxu0 0.0
    %1624 = vmatpush1.msra.mxu0 0.0
    %1625 = vmatprep.subr.mxu0 0.0
    %1626 = vmatpush1.msra.mxu0 0.0
    %1627 = vmatprep.subr.mxu0 0.0
    %1628 = vmatpush1.msra.mxu0 0.0
    %1629 = vmatprep.subr.mxu0 0.0
    %1630 = vmatpush1.msra.mxu0 0.0
    %1631 = vmatprep.subr.mxu0 0.0
    %1632 = vmatpush1.msra.mxu0 0.0
    %1633 = vmatprep.subr.mxu0 0.0
    %1634 = vmatpush1.msra.mxu0 0.0
    %1635 = vmatprep.subr.mxu0 0.0
    %1636 = vmatpush1.msra.mxu0 0.0
    %1637 = vmatprep.subr.mxu0 0.0
    %1638 = vmatpush1.msra.mxu0 0.0
    %1639 = vmatprep.subr.mxu0 0.0
    %1640 = vmatpush1.msra.mxu0 0.0
    %1641 = vmatprep.subr.mxu0 0.0
    %1642 = vmatpush1.msra.mxu0 0.0
    %1643 = vmatprep.subr.mxu0 0.0
    %1644 = vmatpush1.msra.mxu0 0.0
    %1645 = vmatprep.subr.mxu0 0.0
    %1646 = vmatpush1.msra.mxu0 0.0
    %1647 = vmatprep.mubr.f32.mxu0 0.0
    %1648 = vmatmul.mubr.f32.gmra.mrb[0].mxu0 %v166
    %v1649 = vpop.f32.mrb[0].mxu0
    %v1650 = vadd.f32 0.0, %v1649
    %v1651 = vpop.f32.mrb[0].mxu0
    %1652 = vdwg.mxu0
    %v1653 = vadd.f32 %v341, %v1650
    %v1654 = vxor.u32 %v1653, 2147483648
    %v1655 = vmul.f32 %v1654, 1.442695
    %v1656 = vpow.pop %v1655
    %v1657 = vadd.f32 %v1656, 1.0
    %v1658 = vrcp.pop %v1657
    %v1659 = vmul.f32 1.0, %v1658
    %v1660 = vtanh.pop %v1653
    %v1661 = vmul.f32 %v1659, 0.0
    %1663 = vrot.lane.b32.xlu0 %v1660, 64
    %v1664 = vpop.permute.xlu0 %1663
    %v1666 = vmul.f32 %v1659, %v1664
    %1668 = vrot.lane.b32.xlu0 %v1666, 32
    %v1669 = vpop.permute.xlu0 %1668
    %v1671 = vadd.f32 %v1661, %v1669
    %v1672 = vtanh.pop %v1671
    %1674 = vrot.lane.b32.xlu0 %v1672, 64
    %v1675 = vpop.permute.xlu0 %1674
    %v1677 = vmul.f32 %v1659, %v1675
    %1679 = vrot.lane.b32.xlu0 %v1677, 32
    %v1680 = vpop.permute.xlu0 %1679
    %v1681 = vsel %vm164, %v1680, 0
    %1683 = vmatprep.subr.mxu0 0.0
    %1684 = vmatpush1.msra.mxu0 %v1579
    %1685 = vmatprep.subr.mxu0 0.0
    %1686 = vmatpush1.msra.mxu0 %v1580
    %1687 = vmatprep.subr.mxu0 0.0
    %1688 = vmatpush1.msra.mxu0 %v1581
    %1689 = vmatprep.subr.mxu0 0.0
    %1690 = vmatpush1.msra.mxu0 %v1582
    %1691 = vmatprep.subr.mxu0 0.0
    %1692 = vmatpush1.msra.mxu0 0.0
    %1693 = vmatprep.subr.mxu0 0.0
    %1694 = vmatpush1.msra.mxu0 0.0
    %1695 = vmatprep.subr.mxu0 0.0
    %1696 = vmatpush1.msra.mxu0 0.0
    %1697 = vmatprep.subr.mxu0 0.0
    %1698 = vmatpush1.msra.mxu0 0.0
    %1699 = vmatprep.subr.mxu0 0.0
    %1700 = vmatpush1.msra.mxu0 0.0
    %1701 = vmatprep.subr.mxu0 0.0
    %1702 = vmatpush1.msra.mxu0 0.0
    %1703 = vmatprep.subr.mxu0 0.0
    %1704 = vmatpush1.msra.mxu0 0.0
    %1705 = vmatprep.subr.mxu0 0.0
    %1706 = vmatpush1.msra.mxu0 0.0
    %1707 = vmatprep.subr.mxu0 0.0
    %1708 = vmatpush1.msra.mxu0 0.0
    %1709 = vmatprep.subr.mxu0 0.0
    %1710 = vmatpush1.msra.mxu0 0.0
    %1711 = vmatprep.subr.mxu0 0.0
    %1712 = vmatpush1.msra.mxu0 0.0
    %1713 = vmatprep.subr.mxu0 0.0
    %1714 = vmatpush1.msra.mxu0 0.0
    %1715 = vmatprep.subr.mxu0 0.0
    %1716 = vmatpush1.msra.mxu0 0.0
    %1717 = vmatprep.subr.mxu0 0.0
    %1718 = vmatpush1.msra.mxu0 0.0
    %1719 = vmatprep.subr.mxu0 0.0
    %1720 = vmatpush1.msra.mxu0 0.0
    %1721 = vmatprep.subr.mxu0 0.0
    %1722 = vmatpush1.msra.mxu0 0.0
    %1723 = vmatprep.subr.mxu0 0.0
    %1724 = vmatpush1.msra.mxu0 0.0
    %1725 = vmatprep.subr.mxu0 0.0
    %1726 = vmatpush1.msra.mxu0 0.0
    %1727 = vmatprep.subr.mxu0 0.0
    %1728 = vmatpush1.msra.mxu0 0.0
    %1729 = vmatprep.subr.mxu0 0.0
    %1730 = vmatpush1.msra.mxu0 0.0
    %1731 = vmatprep.subr.mxu0 0.0
    %1732 = vmatpush1.msra.mxu0 0.0
    %1733 = vmatprep.subr.mxu0 0.0
    %1734 = vmatpush1.msra.mxu0 0.0
    %1735 = vmatprep.subr.mxu0 0.0
    %1736 = vmatpush1.msra.mxu0 0.0
    %1737 = vmatprep.subr.mxu0 0.0
    %1738 = vmatpush1.msra.mxu0 0.0
    %1739 = vmatprep.subr.mxu0 0.0
    %1740 = vmatpush1.msra.mxu0 0.0
    %1741 = vmatprep.subr.mxu0 0.0
    %1742 = vmatpush1.msra.mxu0 0.0
    %1743 = vmatprep.subr.mxu0 0.0
    %1744 = vmatpush1.msra.mxu0 0.0
    %1745 = vmatprep.subr.mxu0 0.0
    %1746 = vmatpush1.msra.mxu0 0.0
    %1747 = vmatprep.mubr.f32.mxu0 0.0
    %1748 = vmatmul.mubr.f32.gmra.mrb[0].mxu0 %v1681
    %v1749 = vpop.f32.mrb[0].mxu0
    %v1750 = vadd.f32 0.0, %v1749
    %v1751 = vpop.f32.mrb[0].mxu0
    %1752 = vdwg.mxu0
    %v1753 = vadd.f32 %v518, %v1750
    %v1754 = vxor.u32 %v1753, 2147483648
    %v1755 = vmul.f32 %v1754, 1.442695
    %v1756 = vpow.pop %v1755
    %v1757 = vadd.f32 %v1756, 1.0
    %v1758 = vrcp.pop %v1757
    %v1759 = vmul.f32 1.0, %v1758
    %v1760 = vtanh.pop %v1753
    %v1761 = vmul.f32 %v1759, %v1671
    %1763 = vrot.lane.b32.xlu0 %v1760, 64
    %v1764 = vpop.permute.xlu0 %1763
    %v1766 = vmul.f32 %v1759, %v1764
    %1768 = vrot.lane.b32.xlu0 %v1766, 32
    %v1769 = vpop.permute.xlu0 %1768
    %v1771 = vadd.f32 %v1761, %v1769
    %v1772 = vtanh.pop %v1771
    %1774 = vrot.lane.b32.xlu0 %v1772, 64
    %v1775 = vpop.permute.xlu0 %1774
    %v1777 = vmul.f32 %v1759, %v1775
    %1779 = vrot.lane.b32.xlu0 %v1777, 32
    %v1780 = vpop.permute.xlu0 %1779
    %v1781 = vsel %vm164, %v1780, 0
    %1783 = vmatprep.subr.mxu0 0.0
    %1784 = vmatpush1.msra.mxu0 %v1579
    %1785 = vmatprep.subr.mxu0 0.0
    %1786 = vmatpush1.msra.mxu0 %v1580
    %1787 = vmatprep.subr.mxu0 0.0
    %1788 = vmatpush1.msra.mxu0 %v1581
    %1789 = vmatprep.subr.mxu0 0.0
    %1790 = vmatpush1.msra.mxu0 %v1582
    %1791 = vmatprep.subr.mxu0 0.0
    %1792 = vmatpush1.msra.mxu0 0.0
    %1793 = vmatprep.subr.mxu0 0.0
    %1794 = vmatpush1.msra.mxu0 0.0
    %1795 = vmatprep.subr.mxu0 0.0
    %1796 = vmatpush1.msra.mxu0 0.0
    %1797 = vmatprep.subr.mxu0 0.0
    %1798 = vmatpush1.msra.mxu0 0.0
    %1799 = vmatprep.subr.mxu0 0.0
    %1800 = vmatpush1.msra.mxu0 0.0
    %1801 = vmatprep.subr.mxu0 0.0
    %1802 = vmatpush1.msra.mxu0 0.0
    %1803 = vmatprep.subr.mxu0 0.0
    %1804 = vmatpush1.msra.mxu0 0.0
    %1805 = vmatprep.subr.mxu0 0.0
    %1806 = vmatpush1.msra.mxu0 0.0
    %1807 = vmatprep.subr.mxu0 0.0
    %1808 = vmatpush1.msra.mxu0 0.0
    %1809 = vmatprep.subr.mxu0 0.0
    %1810 = vmatpush1.msra.mxu0 0.0
    %1811 = vmatprep.subr.mxu0 0.0
    %1812 = vmatpush1.msra.mxu0 0.0
    %1813 = vmatprep.subr.mxu0 0.0
    %1814 = vmatpush1.msra.mxu0 0.0
    %1815 = vmatprep.subr.mxu0 0.0
    %1816 = vmatpush1.msra.mxu0 0.0
    %1817 = vmatprep.subr.mxu0 0.0
    %1818 = vmatpush1.msra.mxu0 0.0
    %1819 = vmatprep.subr.mxu0 0.0
    %1820 = vmatpush1.msra.mxu0 0.0
    %1821 = vmatprep.subr.mxu0 0.0
    %1822 = vmatpush1.msra.mxu0 0.0
    %1823 = vmatprep.subr.mxu0 0.0
    %1824 = vmatpush1.msra.mxu0 0.0
    %1825 = vmatprep.subr.mxu0 0.0
    %1826 = vmatpush1.msra.mxu0 0.0
    %1827 = vmatprep.subr.mxu0 0.0
    %1828 = vmatpush1.msra.mxu0 0.0
    %1829 = vmatprep.subr.mxu0 0.0
    %1830 = vmatpush1.msra.mxu0 0.0
    %1831 = vmatprep.subr.mxu0 0.0
    %1832 = vmatpush1.msra.mxu0 0.0
    %1833 = vmatprep.subr.mxu0 0.0
    %1834 = vmatpush1.msra.mxu0 0.0
    %1835 = vmatprep.subr.mxu0 0.0
    %1836 = vmatpush1.msra.mxu0 0.0
    %1837 = vmatprep.subr.mxu0 0.0
    %1838 = vmatpush1.msra.mxu0 0.0
    %1839 = vmatprep.subr.mxu0 0.0
    %1840 = vmatpush1.msra.mxu0 0.0
    %1841 = vmatprep.subr.mxu0 0.0
    %1842 = vmatpush1.msra.mxu0 0.0
    %1843 = vmatprep.subr.mxu0 0.0
    %1844 = vmatpush1.msra.mxu0 0.0
    %1845 = vmatprep.subr.mxu0 0.0
    %1846 = vmatpush1.msra.mxu0 0.0
    %1847 = vmatprep.mubr.f32.mxu0 0.0
    %1848 = vmatmul.mubr.f32.gmra.mrb[0].mxu0 %v1781
    %v1849 = vpop.f32.mrb[0].mxu0
    %v1850 = vadd.f32 0.0, %v1849
    %v1851 = vpop.f32.mrb[0].mxu0
    %1852 = vdwg.mxu0
    %v1853 = vadd.f32 %v695, %v1850
    %v1854 = vxor.u32 %v1853, 2147483648
    %v1855 = vmul.f32 %v1854, 1.442695
    %v1856 = vpow.pop %v1855
    %v1857 = vadd.f32 %v1856, 1.0
    %v1858 = vrcp.pop %v1857
    %v1859 = vmul.f32 1.0, %v1858
    %v1860 = vtanh.pop %v1853
    %v1861 = vmul.f32 %v1859, %v1771
    %1863 = vrot.lane.b32.xlu0 %v1860, 64
    %v1864 = vpop.permute.xlu0 %1863
    %v1866 = vmul.f32 %v1859, %v1864
    %1868 = vrot.lane.b32.xlu0 %v1866, 32
    %v1869 = vpop.permute.xlu0 %1868
    %v1871 = vadd.f32 %v1861, %v1869
    %v1872 = vtanh.pop %v1871
    %1874 = vrot.lane.b32.xlu0 %v1872, 64
    %v1875 = vpop.permute.xlu0 %1874
    %v1877 = vmul.f32 %v1859, %v1875
    %1879 = vrot.lane.b32.xlu0 %v1877, 32
    %v1880 = vpop.permute.xlu0 %1879
    %v1881 = vsel %vm164, %v1880, 0
    %1883 = vmatprep.subr.mxu0 0.0
    %1884 = vmatpush1.msra.mxu0 %v1579
    %1885 = vmatprep.subr.mxu0 0.0
    %1886 = vmatpush1.msra.mxu0 %v1580
    %1887 = vmatprep.subr.mxu0 0.0
    %1888 = vmatpush1.msra.mxu0 %v1581
    %1889 = vmatprep.subr.mxu0 0.0
    %1890 = vmatpush1.msra.mxu0 %v1582
    %1891 = vmatprep.subr.mxu0 0.0
    %1892 = vmatpush1.msra.mxu0 0.0
    %1893 = vmatprep.subr.mxu0 0.0
    %1894 = vmatpush1.msra.mxu0 0.0
    %1895 = vmatprep.subr.mxu0 0.0
    %1896 = vmatpush1.msra.mxu0 0.0
    %1897 = vmatprep.subr.mxu0 0.0
    %1898 = vmatpush1.msra.mxu0 0.0
    %1899 = vmatprep.subr.mxu0 0.0
    %1900 = vmatpush1.msra.mxu0 0.0
    %1901 = vmatprep.subr.mxu0 0.0
    %1902 = vmatpush1.msra.mxu0 0.0
    %1903 = vmatprep.subr.mxu0 0.0
    %1904 = vmatpush1.msra.mxu0 0.0
    %1905 = vmatprep.subr.mxu0 0.0
    %1906 = vmatpush1.msra.mxu0 0.0
    %1907 = vmatprep.subr.mxu0 0.0
    %1908 = vmatpush1.msra.mxu0 0.0
    %1909 = vmatprep.subr.mxu0 0.0
    %1910 = vmatpush1.msra.mxu0 0.0
    %1911 = vmatprep.subr.mxu0 0.0
    %1912 = vmatpush1.msra.mxu0 0.0
    %1913 = vmatprep.subr.mxu0 0.0
    %1914 = vmatpush1.msra.mxu0 0.0
    %1915 = vmatprep.subr.mxu0 0.0
    %1916 = vmatpush1.msra.mxu0 0.0
    %1917 = vmatprep.subr.mxu0 0.0
    %1918 = vmatpush1.msra.mxu0 0.0
    %1919 = vmatprep.subr.mxu0 0.0
    %1920 = vmatpush1.msra.mxu0 0.0
    %1921 = vmatprep.subr.mxu0 0.0
    %1922 = vmatpush1.msra.mxu0 0.0
    %1923 = vmatprep.subr.mxu0 0.0
    %1924 = vmatpush1.msra.mxu0 0.0
    %1925 = vmatprep.subr.mxu0 0.0
    %1926 = vmatpush1.msra.mxu0 0.0
    %1927 = vmatprep.subr.mxu0 0.0
    %1928 = vmatpush1.msra.mxu0 0.0
    %1929 = vmatprep.subr.mxu0 0.0
    %1930 = vmatpush1.msra.mxu0 0.0
    %1931 = vmatprep.subr.mxu0 0.0
    %1932 = vmatpush1.msra.mxu0 0.0
    %1933 = vmatprep.subr.mxu0 0.0
    %1934 = vmatpush1.msra.mxu0 0.0
    %1935 = vmatprep.subr.mxu0 0.0
    %1936 = vmatpush1.msra.mxu0 0.0
    %1937 = vmatprep.subr.mxu0 0.0
    %1938 = vmatpush1.msra.mxu0 0.0
    %1939 = vmatprep.subr.mxu0 0.0
    %1940 = vmatpush1.msra.mxu0 0.0
    %1941 = vmatprep.subr.mxu0 0.0
    %1942 = vmatpush1.msra.mxu0 0.0
    %1943 = vmatprep.subr.mxu0 0.0
    %1944 = vmatpush1.msra.mxu0 0.0
    %1945 = vmatprep.subr.mxu0 0.0
    %1946 = vmatpush1.msra.mxu0 0.0
    %1947 = vmatprep.mubr.f32.mxu0 0.0
    %1948 = vmatmul.mubr.f32.gmra.mrb[0].mxu0 %v1881
    %v1949 = vpop.f32.mrb[0].mxu0
    %v1950 = vadd.f32 0.0, %v1949
    %v1951 = vpop.f32.mrb[0].mxu0
    %1952 = vdwg.mxu0
    %v1953 = vadd.f32 %v872, %v1950
    %v1954 = vxor.u32 %v1953, 2147483648
    %v1955 = vmul.f32 %v1954, 1.442695
    %v1956 = vpow.pop %v1955
    %v1957 = vadd.f32 %v1956, 1.0
    %v1958 = vrcp.pop %v1957
    %v1959 = vmul.f32 1.0, %v1958
    %v1960 = vtanh.pop %v1953
    %v1961 = vmul.f32 %v1959, %v1871
    %1963 = vrot.lane.b32.xlu0 %v1960, 64
    %v1964 = vpop.permute.xlu0 %1963
    %v1966 = vmul.f32 %v1959, %v1964
    %1968 = vrot.lane.b32.xlu0 %v1966, 32
    %v1969 = vpop.permute.xlu0 %1968
    %v1971 = vadd.f32 %v1961, %v1969
    %v1972 = vtanh.pop %v1971
    %1974 = vrot.lane.b32.xlu0 %v1972, 64
    %v1975 = vpop.permute.xlu0 %1974
    %v1977 = vmul.f32 %v1959, %v1975
    %1979 = vrot.lane.b32.xlu0 %v1977, 32
    %v1980 = vpop.permute.xlu0 %1979
    %v1981 = vsel %vm164, %v1980, 0
    %1983 = vmatprep.subr.mxu0 0.0
    %1984 = vmatpush1.msra.mxu0 %v1579
    %1985 = vmatprep.subr.mxu0 0.0
    %1986 = vmatpush1.msra.mxu0 %v1580
    %1987 = vmatprep.subr.mxu0 0.0
    %1988 = vmatpush1.msra.mxu0 %v1581
    %1989 = vmatprep.subr.mxu0 0.0
    %1990 = vmatpush1.msra.mxu0 %v1582
    %1991 = vmatprep.subr.mxu0 0.0
    %1992 = vmatpush1.msra.mxu0 0.0
    %1993 = vmatprep.subr.mxu0 0.0
    %1994 = vmatpush1.msra.mxu0 0.0
    %1995 = vmatprep.subr.mxu0 0.0
    %1996 = vmatpush1.msra.mxu0 0.0
    %1997 = vmatprep.subr.mxu0 0.0
    %1998 = vmatpush1.msra.mxu0 0.0
    %1999 = vmatprep.subr.mxu0 0.0
    %2000 = vmatpush1.msra.mxu0 0.0
    %2001 = vmatprep.subr.mxu0 0.0
    %2002 = vmatpush1.msra.mxu0 0.0
    %2003 = vmatprep.subr.mxu0 0.0
    %2004 = vmatpush1.msra.mxu0 0.0
    %2005 = vmatprep.subr.mxu0 0.0
    %2006 = vmatpush1.msra.mxu0 0.0
    %2007 = vmatprep.subr.mxu0 0.0
    %2008 = vmatpush1.msra.mxu0 0.0
    %2009 = vmatprep.subr.mxu0 0.0
    %2010 = vmatpush1.msra.mxu0 0.0
    %2011 = vmatprep.subr.mxu0 0.0
    %2012 = vmatpush1.msra.mxu0 0.0
    %2013 = vmatprep.subr.mxu0 0.0
    %2014 = vmatpush1.msra.mxu0 0.0
    %2015 = vmatprep.subr.mxu0 0.0
    %2016 = vmatpush1.msra.mxu0 0.0
    %2017 = vmatprep.subr.mxu0 0.0
    %2018 = vmatpush1.msra.mxu0 0.0
    %2019 = vmatprep.subr.mxu0 0.0
    %2020 = vmatpush1.msra.mxu0 0.0
    %2021 = vmatprep.subr.mxu0 0.0
    %2022 = vmatpush1.msra.mxu0 0.0
    %2023 = vmatprep.subr.mxu0 0.0
    %2024 = vmatpush1.msra.mxu0 0.0
    %2025 = vmatprep.subr.mxu0 0.0
    %2026 = vmatpush1.msra.mxu0 0.0
    %2027 = vmatprep.subr.mxu0 0.0
    %2028 = vmatpush1.msra.mxu0 0.0
    %2029 = vmatprep.subr.mxu0 0.0
    %2030 = vmatpush1.msra.mxu0 0.0
    %2031 = vmatprep.subr.mxu0 0.0
    %2032 = vmatpush1.msra.mxu0 0.0
    %2033 = vmatprep.subr.mxu0 0.0
    %2034 = vmatpush1.msra.mxu0 0.0
    %2035 = vmatprep.subr.mxu0 0.0
    %2036 = vmatpush1.msra.mxu0 0.0
    %2037 = vmatprep.subr.mxu0 0.0
    %2038 = vmatpush1.msra.mxu0 0.0
    %2039 = vmatprep.subr.mxu0 0.0
    %2040 = vmatpush1.msra.mxu0 0.0
    %2041 = vmatprep.subr.mxu0 0.0
    %2042 = vmatpush1.msra.mxu0 0.0
    %2043 = vmatprep.subr.mxu0 0.0
    %2044 = vmatpush1.msra.mxu0 0.0
    %2045 = vmatprep.subr.mxu0 0.0
    %2046 = vmatpush1.msra.mxu0 0.0
    %2047 = vmatprep.mubr.f32.mxu0 0.0
    %2048 = vmatmul.mubr.f32.gmra.mrb[0].mxu0 %v1981
    %v2049 = vpop.f32.mrb[0].mxu0
    %v2050 = vadd.f32 0.0, %v2049
    %v2051 = vpop.f32.mrb[0].mxu0
    %2052 = vdwg.mxu0
    %v2053 = vadd.f32 %v1045, %v2050
    %v2054 = vxor.u32 %v2053, 2147483648
    %v2055 = vmul.f32 %v2054, 1.442695
    %v2056 = vpow.pop %v2055
    %v2057 = vadd.f32 %v2056, 1.0
    %v2058 = vrcp.pop %v2057
    %v2059 = vmul.f32 1.0, %v2058
    %v2060 = vtanh.pop %v2053
    %v2061 = vmul.f32 %v2059, %v1971
    %2063 = vrot.lane.b32.xlu0 %v2060, 64
    %v2064 = vpop.permute.xlu0 %2063
    %v2066 = vmul.f32 %v2059, %v2064
    %2068 = vrot.lane.b32.xlu0 %v2066, 32
    %v2069 = vpop.permute.xlu0 %2068
    %v2071 = vadd.f32 %v2061, %v2069
    %v2072 = vtanh.pop %v2071
    %2074 = vrot.lane.b32.xlu0 %v2072, 64
    %v2075 = vpop.permute.xlu0 %2074
    %v2077 = vmul.f32 %v2059, %v2075
    %2079 = vrot.lane.b32.xlu0 %v2077, 32
    %v2080 = vpop.permute.xlu0 %2079
    %v2081 = vsel %vm164, %v2080, 0
    %2083 = vmatprep.subr.mxu0 0.0
    %2084 = vmatpush1.msra.mxu0 %v1579
    %2085 = vmatprep.subr.mxu0 0.0
    %2086 = vmatpush1.msra.mxu0 %v1580
    %2087 = vmatprep.subr.mxu0 0.0
    %2088 = vmatpush1.msra.mxu0 %v1581
    %2089 = vmatprep.subr.mxu0 0.0
    %2090 = vmatpush1.msra.mxu0 %v1582
    %2091 = vmatprep.subr.mxu0 0.0
    %2092 = vmatpush1.msra.mxu0 0.0
    %2093 = vmatprep.subr.mxu0 0.0
    %2094 = vmatpush1.msra.mxu0 0.0
    %2095 = vmatprep.subr.mxu0 0.0
    %2096 = vmatpush1.msra.mxu0 0.0
    %2097 = vmatprep.subr.mxu0 0.0
    %2098 = vmatpush1.msra.mxu0 0.0
    %2099 = vmatprep.subr.mxu0 0.0
    %2100 = vmatpush1.msra.mxu0 0.0
    %2101 = vmatprep.subr.mxu0 0.0
    %2102 = vmatpush1.msra.mxu0 0.0
    %2103 = vmatprep.subr.mxu0 0.0
    %2104 = vmatpush1.msra.mxu0 0.0
    %2105 = vmatprep.subr.mxu0 0.0
    %2106 = vmatpush1.msra.mxu0 0.0
    %2107 = vmatprep.subr.mxu0 0.0
    %2108 = vmatpush1.msra.mxu0 0.0
    %2109 = vmatprep.subr.mxu0 0.0
    %2110 = vmatpush1.msra.mxu0 0.0
    %2111 = vmatprep.subr.mxu0 0.0
    %2112 = vmatpush1.msra.mxu0 0.0
    %2113 = vmatprep.subr.mxu0 0.0
    %2114 = vmatpush1.msra.mxu0 0.0
    %2115 = vmatprep.subr.mxu0 0.0
    %2116 = vmatpush1.msra.mxu0 0.0
    %2117 = vmatprep.subr.mxu0 0.0
    %2118 = vmatpush1.msra.mxu0 0.0
    %2119 = vmatprep.subr.mxu0 0.0
    %2120 = vmatpush1.msra.mxu0 0.0
    %2121 = vmatprep.subr.mxu0 0.0
    %2122 = vmatpush1.msra.mxu0 0.0
    %2123 = vmatprep.subr.mxu0 0.0
    %2124 = vmatpush1.msra.mxu0 0.0
    %2125 = vmatprep.subr.mxu0 0.0
    %2126 = vmatpush1.msra.mxu0 0.0
    %2127 = vmatprep.subr.mxu0 0.0
    %2128 = vmatpush1.msra.mxu0 0.0
    %2129 = vmatprep.subr.mxu0 0.0
    %2130 = vmatpush1.msra.mxu0 0.0
    %2131 = vmatprep.subr.mxu0 0.0
    %2132 = vmatpush1.msra.mxu0 0.0
    %2133 = vmatprep.subr.mxu0 0.0
    %2134 = vmatpush1.msra.mxu0 0.0
    %2135 = vmatprep.subr.mxu0 0.0
    %2136 = vmatpush1.msra.mxu0 0.0
    %2137 = vmatprep.subr.mxu0 0.0
    %2138 = vmatpush1.msra.mxu0 0.0
    %2139 = vmatprep.subr.mxu0 0.0
    %2140 = vmatpush1.msra.mxu0 0.0
    %2141 = vmatprep.subr.mxu0 0.0
    %2142 = vmatpush1.msra.mxu0 0.0
    %2143 = vmatprep.subr.mxu0 0.0
    %2144 = vmatpush1.msra.mxu0 0.0
    %2145 = vmatprep.subr.mxu0 0.0
    %2146 = vmatpush1.msra.mxu0 0.0
    %2147 = vmatprep.mubr.f32.mxu0 0.0
    %2148 = vmatmul.mubr.f32.gmra.mrb[0].mxu0 %v2081
    %v2149 = vpop.f32.mrb[0].mxu0
    %v2150 = vadd.f32 0.0, %v2149
    %v2151 = vpop.f32.mrb[0].mxu0
    %2152 = vdwg.mxu0
    %v2153 = vadd.f32 %v1222, %v2150
    %v2154 = vxor.u32 %v2153, 2147483648
    %v2155 = vmul.f32 %v2154, 1.442695
    %v2156 = vpow.pop %v2155
    %v2157 = vadd.f32 %v2156, 1.0
    %v2158 = vrcp.pop %v2157
    %v2159 = vmul.f32 1.0, %v2158
    %v2160 = vtanh.pop %v2153
    %v2161 = vmul.f32 %v2159, %v2071
    %2163 = vrot.lane.b32.xlu0 %v2160, 64
    %v2164 = vpop.permute.xlu0 %2163
    %v2166 = vmul.f32 %v2159, %v2164
    %2168 = vrot.lane.b32.xlu0 %v2166, 32
    %v2169 = vpop.permute.xlu0 %2168
    %v2171 = vadd.f32 %v2161, %v2169
    %v2172 = vtanh.pop %v2171
    %2174 = vrot.lane.b32.xlu0 %v2172, 64
    %v2175 = vpop.permute.xlu0 %2174
    %v2177 = vmul.f32 %v2159, %v2175
    %2179 = vrot.lane.b32.xlu0 %v2177, 32
    %v2180 = vpop.permute.xlu0 %2179
    %v2181 = vsel %vm164, %v2180, 0
    %2183 = vmatprep.subr.mxu0 0.0
    %2184 = vmatpush1.msra.mxu0 %v1579
    %2185 = vmatprep.subr.mxu0 0.0
    %2186 = vmatpush1.msra.mxu0 %v1580
    %2187 = vmatprep.subr.mxu0 0.0
    %2188 = vmatpush1.msra.mxu0 %v1581
    %2189 = vmatprep.subr.mxu0 0.0
    %2190 = vmatpush1.msra.mxu0 %v1582
    %2191 = vmatprep.subr.mxu0 0.0
    %2192 = vmatpush1.msra.mxu0 0.0
    %2193 = vmatprep.subr.mxu0 0.0
    %2194 = vmatpush1.msra.mxu0 0.0
    %2195 = vmatprep.subr.mxu0 0.0
    %2196 = vmatpush1.msra.mxu0 0.0
    %2197 = vmatprep.subr.mxu0 0.0
    %2198 = vmatpush1.msra.mxu0 0.0
    %2199 = vmatprep.subr.mxu0 0.0
    %2200 = vmatpush1.msra.mxu0 0.0
    %2201 = vmatprep.subr.mxu0 0.0
    %2202 = vmatpush1.msra.mxu0 0.0
    %2203 = vmatprep.subr.mxu0 0.0
    %2204 = vmatpush1.msra.mxu0 0.0
    %2205 = vmatprep.subr.mxu0 0.0
    %2206 = vmatpush1.msra.mxu0 0.0
    %2207 = vmatprep.subr.mxu0 0.0
    %2208 = vmatpush1.msra.mxu0 0.0
    %2209 = vmatprep.subr.mxu0 0.0
    %2210 = vmatpush1.msra.mxu0 0.0
    %2211 = vmatprep.subr.mxu0 0.0
    %2212 = vmatpush1.msra.mxu0 0.0
    %2213 = vmatprep.subr.mxu0 0.0
    %2214 = vmatpush1.msra.mxu0 0.0
    %2215 = vmatprep.subr.mxu0 0.0
    %2216 = vmatpush1.msra.mxu0 0.0
    %2217 = vmatprep.subr.mxu0 0.0
    %2218 = vmatpush1.msra.mxu0 0.0
    %2219 = vmatprep.subr.mxu0 0.0
    %2220 = vmatpush1.msra.mxu0 0.0
    %2221 = vmatprep.subr.mxu0 0.0
    %2222 = vmatpush1.msra.mxu0 0.0
    %2223 = vmatprep.subr.mxu0 0.0
    %2224 = vmatpush1.msra.mxu0 0.0
    %2225 = vmatprep.subr.mxu0 0.0
    %2226 = vmatpush1.msra.mxu0 0.0
    %2227 = vmatprep.subr.mxu0 0.0
    %2228 = vmatpush1.msra.mxu0 0.0
    %2229 = vmatprep.subr.mxu0 0.0
    %2230 = vmatpush1.msra.mxu0 0.0
    %2231 = vmatprep.subr.mxu0 0.0
    %2232 = vmatpush1.msra.mxu0 0.0
    %2233 = vmatprep.subr.mxu0 0.0
    %2234 = vmatpush1.msra.mxu0 0.0
    %2235 = vmatprep.subr.mxu0 0.0
    %2236 = vmatpush1.msra.mxu0 0.0
    %2237 = vmatprep.subr.mxu0 0.0
    %2238 = vmatpush1.msra.mxu0 0.0
    %2239 = vmatprep.subr.mxu0 0.0
    %2240 = vmatpush1.msra.mxu0 0.0
    %2241 = vmatprep.subr.mxu0 0.0
    %2242 = vmatpush1.msra.mxu0 0.0
    %2243 = vmatprep.subr.mxu0 0.0
    %2244 = vmatpush1.msra.mxu0 0.0
    %2245 = vmatprep.subr.mxu0 0.0
    %2246 = vmatpush1.msra.mxu0 0.0
    %2247 = vmatprep.mubr.f32.mxu0 0.0
    %2248 = vmatmul.mubr.f32.gmra.mrb[0].mxu0 %v2181
    %v2249 = vpop.f32.mrb[0].mxu0
    %v2250 = vadd.f32 0.0, %v2249
    %v2251 = vpop.f32.mrb[0].mxu0
    %2252 = vdwg.mxu0
    %v2253 = vadd.f32 %v1399, %v2250
    %v2254 = vxor.u32 %v2253, 2147483648
    %v2255 = vmul.f32 %v2254, 1.442695
    %v2256 = vpow.pop %v2255
    %v2257 = vadd.f32 %v2256, 1.0
    %v2258 = vrcp.pop %v2257
    %v2259 = vmul.f32 1.0, %v2258
    %v2260 = vtanh.pop %v2253
    %v2261 = vmul.f32 %v2259, %v2171
    %2263 = vrot.lane.b32.xlu0 %v2260, 64
    %v2264 = vpop.permute.xlu0 %2263
    %v2266 = vmul.f32 %v2259, %v2264
    %2268 = vrot.lane.b32.xlu0 %v2266, 32
    %v2269 = vpop.permute.xlu0 %2268
    %v2271 = vadd.f32 %v2261, %v2269
    %v2272 = vtanh.pop %v2271
    %2274 = vrot.lane.b32.xlu0 %v2272, 64
    %v2275 = vpop.permute.xlu0 %2274
    %v2277 = vmul.f32 %v2259, %v2275
    %2279 = vrot.lane.b32.xlu0 %v2277, 32
    %v2280 = vpop.permute.xlu0 %2279
    %v2281 = vsel %vm164, %v2280, 0
    %2283 = vmatprep.subr.mxu0 0.0
    %2284 = vmatpush1.msra.mxu0 %v1579
    %2285 = vmatprep.subr.mxu0 0.0
    %2286 = vmatpush1.msra.mxu0 %v1580
    %2287 = vmatprep.subr.mxu0 0.0
    %2288 = vmatpush1.msra.mxu0 %v1581
    %2289 = vmatprep.subr.mxu0 0.0
    %2290 = vmatpush1.msra.mxu0 %v1582
    %2291 = vmatprep.subr.mxu0 0.0
    %2292 = vmatpush1.msra.mxu0 0.0
    %2293 = vmatprep.subr.mxu0 0.0
    %2294 = vmatpush1.msra.mxu0 0.0
    %2295 = vmatprep.subr.mxu0 0.0
    %2296 = vmatpush1.msra.mxu0 0.0
    %2297 = vmatprep.subr.mxu0 0.0
    %2298 = vmatpush1.msra.mxu0 0.0
    %2299 = vmatprep.subr.mxu0 0.0
    %2300 = vmatpush1.msra.mxu0 0.0
    %2301 = vmatprep.subr.mxu0 0.0
    %2302 = vmatpush1.msra.mxu0 0.0
    %2303 = vmatprep.subr.mxu0 0.0
    %2304 = vmatpush1.msra.mxu0 0.0
    %2305 = vmatprep.subr.mxu0 0.0
    %2306 = vmatpush1.msra.mxu0 0.0
    %2307 = vmatprep.subr.mxu0 0.0
    %2308 = vmatpush1.msra.mxu0 0.0
    %2309 = vmatprep.subr.mxu0 0.0
    %2310 = vmatpush1.msra.mxu0 0.0
    %2311 = vmatprep.subr.mxu0 0.0
    %2312 = vmatpush1.msra.mxu0 0.0
    %2313 = vmatprep.subr.mxu0 0.0
    %2314 = vmatpush1.msra.mxu0 0.0
    %2315 = vmatprep.subr.mxu0 0.0
    %2316 = vmatpush1.msra.mxu0 0.0
    %2317 = vmatprep.subr.mxu0 0.0
    %2318 = vmatpush1.msra.mxu0 0.0
    %2319 = vmatprep.subr.mxu0 0.0
    %2320 = vmatpush1.msra.mxu0 0.0
    %2321 = vmatprep.subr.mxu0 0.0
    %2322 = vmatpush1.msra.mxu0 0.0
    %2323 = vmatprep.subr.mxu0 0.0
    %2324 = vmatpush1.msra.mxu0 0.0
    %2325 = vmatprep.subr.mxu0 0.0
    %2326 = vmatpush1.msra.mxu0 0.0
    %2327 = vmatprep.subr.mxu0 0.0
    %2328 = vmatpush1.msra.mxu0 0.0
    %2329 = vmatprep.subr.mxu0 0.0
    %2330 = vmatpush1.msra.mxu0 0.0
    %2331 = vmatprep.subr.mxu0 0.0
    %2332 = vmatpush1.msra.mxu0 0.0
    %2333 = vmatprep.subr.mxu0 0.0
    %2334 = vmatpush1.msra.mxu0 0.0
    %2335 = vmatprep.subr.mxu0 0.0
    %2336 = vmatpush1.msra.mxu0 0.0
    %2337 = vmatprep.subr.mxu0 0.0
    %2338 = vmatpush1.msra.mxu0 0.0
    %2339 = vmatprep.subr.mxu0 0.0
    %2340 = vmatpush1.msra.mxu0 0.0
    %2341 = vmatprep.subr.mxu0 0.0
    %2342 = vmatpush1.msra.mxu0 0.0
    %2343 = vmatprep.subr.mxu0 0.0
    %2344 = vmatpush1.msra.mxu0 0.0
    %2345 = vmatprep.subr.mxu0 0.0
    %2346 = vmatpush1.msra.mxu0 0.0
    %2347 = vmatprep.mubr.f32.mxu0 0.0
    %2348 = vmatmul.mubr.f32.gmra.mrb[0].mxu0 %v2281
    %v2349 = vpop.f32.mrb[0].mxu0
    %v2350 = vadd.f32 0.0, %v2349
    %v2351 = vpop.f32.mrb[0].mxu0
    %2352 = vdwg.mxu0
    %v2353 = vadd.f32 %v1576, %v2350
    %v2354 = vxor.u32 %v2353, 2147483648
    %v2355 = vmul.f32 %v2354, 1.442695
    %v2356 = vpow.pop %v2355
    %v2357 = vadd.f32 %v2356, 1.0
    %v2358 = vrcp.pop %v2357
    %v2359 = vmul.f32 1.0, %v2358
    %v2360 = vtanh.pop %v2353
    %v2361 = vmul.f32 %v2359, %v2271
    %2363 = vrot.lane.b32.xlu0 %v2360, 64
    %v2364 = vpop.permute.xlu0 %2363
    %v2366 = vmul.f32 %v2359, %v2364
    %2368 = vrot.lane.b32.xlu0 %v2366, 32
    %v2369 = vpop.permute.xlu0 %2368
    %v2371 = vadd.f32 %v2361, %v2369
    %v2372 = vtanh.pop %v2371
    %2374 = vrot.lane.b32.xlu0 %v2372, 64
    %v2375 = vpop.permute.xlu0 %2374
    %v2377 = vmul.f32 %v2359, %v2375
    %v2378 = vld [vmem:[%s7] sm:$0xff]
    %v2379 = vld [vmem:[%s7 + $0x8] sm:$0xff]
    %v2380 = vld [vmem:[%s7 + $0x10] sm:$0xff]
    %v2381 = vld [vmem:[%s7 + $0x18] sm:$0xff]
    %v2382 = vld [vmem:[%s8] sm:$0x1]
    %v2384 = vlaneseq
    %v2385 = vshrl.u32 %v2384, 7
    %v2386 = vsub.s32 0, %v2385
    %v2387 = vrot.slane %v2382, %v2386
    %2390 = vrot.lane.b32.xlu0 %v2377, 32
    %v2391 = vpop.permute.xlu0 %2390
    %v2392 = vsel %vm164, %v2391, 0
    %2394 = vmatprep.subr.mxu0 0.0
    %2395 = vmatpush1.msra.mxu0 %v2378
    %2396 = vmatprep.subr.mxu0 0.0
    %2397 = vmatpush1.msra.mxu0 %v2379
    %2398 = vmatprep.subr.mxu0 0.0
    %2399 = vmatpush1.msra.mxu0 %v2380
    %2400 = vmatprep.subr.mxu0 0.0
    %2401 = vmatpush1.msra.mxu0 %v2381
    %2402 = vmatprep.subr.mxu0 0.0
    %2403 = vmatpush1.msra.mxu0 0.0
    %2404 = vmatprep.subr.mxu0 0.0
    %2405 = vmatpush1.msra.mxu0 0.0
    %2406 = vmatprep.subr.mxu0 0.0
    %2407 = vmatpush1.msra.mxu0 0.0
    %2408 = vmatprep.subr.mxu0 0.0
    %2409 = vmatpush1.msra.mxu0 0.0
    %2410 = vmatprep.subr.mxu0 0.0
    %2411 = vmatpush1.msra.mxu0 0.0
    %2412 = vmatprep.subr.mxu0 0.0
    %2413 = vmatpush1.msra.mxu0 0.0
    %2414 = vmatprep.subr.mxu0 0.0
    %2415 = vmatpush1.msra.mxu0 0.0
    %2416 = vmatprep.subr.mxu0 0.0
    %2417 = vmatpush1.msra.mxu0 0.0
    %2418 = vmatprep.subr.mxu0 0.0
    %2419 = vmatpush1.msra.mxu0 0.0
    %2420 = vmatprep.subr.mxu0 0.0
    %2421 = vmatpush1.msra.mxu0 0.0
    %2422 = vmatprep.subr.mxu0 0.0
    %2423 = vmatpush1.msra.mxu0 0.0
    %2424 = vmatprep.subr.mxu0 0.0
    %2425 = vmatpush1.msra.mxu0 0.0
    %2426 = vmatprep.subr.mxu0 0.0
    %2427 = vmatpush1.msra.mxu0 0.0
    %2428 = vmatprep.subr.mxu0 0.0
    %2429 = vmatpush1.msra.mxu0 0.0
    %2430 = vmatprep.subr.mxu0 0.0
    %2431 = vmatpush1.msra.mxu0 0.0
    %2432 = vmatprep.subr.mxu0 0.0
    %2433 = vmatpush1.msra.mxu0 0.0
    %2434 = vmatprep.subr.mxu0 0.0
    %2435 = vmatpush1.msra.mxu0 0.0
    %2436 = vmatprep.subr.mxu0 0.0
    %2437 = vmatpush1.msra.mxu0 0.0
    %2438 = vmatprep.subr.mxu0 0.0
    %2439 = vmatpush1.msra.mxu0 0.0
    %2440 = vmatprep.subr.mxu0 0.0
    %2441 = vmatpush1.msra.mxu0 0.0
    %2442 = vmatprep.subr.mxu0 0.0
    %2443 = vmatpush1.msra.mxu0 0.0
    %2444 = vmatprep.subr.mxu0 0.0
    %2445 = vmatpush1.msra.mxu0 0.0
    %2446 = vmatprep.subr.mxu0 0.0
    %2447 = vmatpush1.msra.mxu0 0.0
    %2448 = vmatprep.subr.mxu0 0.0
    %2449 = vmatpush1.msra.mxu0 0.0
    %2450 = vmatprep.subr.mxu0 0.0
    %2451 = vmatpush1.msra.mxu0 0.0
    %2452 = vmatprep.subr.mxu0 0.0
    %2453 = vmatpush1.msra.mxu0 0.0
    %2454 = vmatprep.subr.mxu0 0.0
    %2455 = vmatpush1.msra.mxu0 0.0
    %2456 = vmatprep.subr.mxu0 0.0
    %2457 = vmatpush1.msra.mxu0 0.0
    %2458 = vmatprep.mubr.f32.mxu0 0.0
    %2459 = vmatmul.mubr.f32.gmra.mrb[0].mxu0 %v2392
    %v2460 = vpop.f32.mrb[0].mxu0
    %v2461 = vadd.f32 %v2387, %v2460
    %v2462 = vpop.f32.mrb[0].mxu0
    %2463 = vdwg.mxu0
    %vm2464 = vcmask 17408
    %2465 = vst.msk [vmem:[#allocation7] sm:$0x3] %vm2464, %v2461
    // Predicated region
    $region46: #{tpu_custom_call.1} parent=1 // pred_check
      _
    $region47: #{tpu_custom_call.1} parent=1 // pred_check_branch
      %2467 = sbr.rel (0) target = $region49
    $region48: #{tpu_custom_call.1} parent=1 // pred_region
      %s2469 = ssub.s32 32, 32
      %2470 = vsyncadd [#allocation4], %s2469
      %s2472 = sshll.u32 [#allocation7], 4
      %s2473 = int_to_ptr.vmem [resolvable:$true] %s2472
      %2475 = dma.vmem_to_hbm [thread:$0]  %s2473, 32, %s9, [#allocation4]
    $region49: #{tpu_custom_call.1} parent=1 // pred_fallthru
      _
    // Predicated region
    $region50: #{tpu_custom_call.1} parent=1 // pred_check
      _
    $region51: #{tpu_custom_call.1} parent=1 // pred_check_branch
      %2477 = sbr.rel (0) target = $region53
    $region52: #{tpu_custom_call.1} parent=1 // pred_region
      %2478 = dma.done [#allocation4], 32
    $region53: #{tpu_custom_call.1} parent=1 // pred_fallthru
      _
    %2479 = vsyncpa [#allocation3], 1
    %2480 = vsyncpa [#allocation6], 1
    %2481 = vsyncpa [#allocation4], 1

</llo_original>
